<compile_context>
chip_gen: v6e
topology: v6e:2x2x1
jax: 0.10.0
libtpu: 0.0.40
codegen_flags: <defaults>
</compile_context>

<pallas_src>
import functools

import jax
import jax.numpy as jnp
from jax.experimental import pallas as pl
from jax.experimental.pallas import tpu as pltpu

BN_EPS = 1e-5
LEAKY_SLOPE = 0.01   # nn.LeakyReLU() default
LANE = 128
SUBLANE_BF16 = 16    # bf16 packs 16 rows per vreg sublane group


def _round_up(x, m):
    return (x + m - 1) // m * m


def _leaky_relu(h):
    # single max instead of compare+select
    return jnp.maximum(h, LEAKY_SLOPE * h)


# --------------------------------------------------------------------------
# Kernel: whole VAE forward on one [block_m, *] batch tile.
# --------------------------------------------------------------------------
def vae_kernel(
    # inputs
    x_ref, eps_ref,          # bf16 batch tiles
    w1_ref, s1_ref,          # encoder layer 1 (BN folded): W [Din,H] bf16, shift [1,H] f32
    w2_ref, s2_ref,          # encoder layer 2
    wh_ref, bh_ref,          # fused heads: [H, 2L] bf16, bias [1, 2L] f32
    wd1_ref, sd1_ref,        # decoder layer 1 (BN folded)
    wd2_ref, sd2_ref,        # decoder layer 2 (BN folded)
    wd3_ref, bd3_ref,        # decoder output layer (bias)
    # outputs
    recon_ref, mulv_ref,     # recon [M, Din], packed [mu || logvar] [M, 2L] f32
    *, latent_pad,
):
    x = x_ref[...]                                   # already bf16

    # ---- encoder: (Linear + folded BN) -> LeakyReLU -> [Dropout = id] x 2 ----
    h = jnp.dot(x, w1_ref[...], preferred_element_type=jnp.float32) + s1_ref[...]
    h = _leaky_relu(h)
    h = jnp.dot(h.astype(jnp.bfloat16), w2_ref[...],
                preferred_element_type=jnp.float32) + s2_ref[...]
    h = _leaky_relu(h)

    # ---- fused latent heads: one matmul producing [mu || logvar] ----
    heads = jnp.dot(h.astype(jnp.bfloat16), wh_ref[...],
                    preferred_element_type=jnp.float32) + bh_ref[...]
    mu = heads[:, :latent_pad]
    logvar = heads[:, latent_pad:]

    # ---- reparameterize: z = mu + eps * exp(0.5 * logvar) ----
    eps = eps_ref[...].astype(jnp.float32)
    z = mu + eps * jnp.exp(0.5 * logvar)

    # ---- decoder ----
    d = jnp.dot(z.astype(jnp.bfloat16), wd1_ref[...],
                preferred_element_type=jnp.float32) + sd1_ref[...]
    d = _leaky_relu(d)
    d = jnp.dot(d.astype(jnp.bfloat16), wd2_ref[...],
                preferred_element_type=jnp.float32) + sd2_ref[...]
    d = _leaky_relu(d)
    d = jnp.dot(d.astype(jnp.bfloat16), wd3_ref[...],
                preferred_element_type=jnp.float32) + bd3_ref[...]

    recon_ref[...] = jnp.maximum(d, 0.0).astype(recon_ref.dtype)   # torch.relu
    mulv_ref[...] = heads.astype(mulv_ref.dtype)                   # packed mu||logvar


# --------------------------------------------------------------------------
# Parameter preparation: fold BN, fuse heads, pad to 128-lane multiples, bf16.
# --------------------------------------------------------------------------
def prepare_params(p, input_dim, hidden_dim, latent_dim):
    d_in = _round_up(input_dim, LANE)
    d_h = _round_up(hidden_dim, LANE)
    d_l = _round_up(latent_dim, LANE)

    def fold(w, gamma, beta, rmean, rvar):
        # Linear(no bias) + eval BatchNorm  ==  x @ (W * scale) + shift
        scale = gamma * jax.lax.rsqrt(rvar + BN_EPS)   # [1, out]
        shift = beta - rmean * scale                   # [1, out]
        return w * scale, shift

    def pad2(a, rows, cols, dtype=None):
        a = jnp.pad(a, ((0, rows - a.shape[0]), (0, cols - a.shape[1])))
        return a.astype(dtype) if dtype is not None else a

    w1, s1 = fold(p["w1"], p["g1"], p["b1"], p["rm1"], p["rv1"])
    w2, s2 = fold(p["w2"], p["g2"], p["b2"], p["rm2"], p["rv2"])
    wd1, sd1 = fold(p["wd1"], p["gd1"], p["bd1"], p["rmd1"], p["rvd1"])
    wd2, sd2 = fold(p["wd2"], p["gd2"], p["bd2"], p["rmd2"], p["rvd2"])

    wh = jnp.concatenate([pad2(p["wmu"], d_h, d_l), pad2(p["wlv"], d_h, d_l)], axis=1)
    bh = jnp.concatenate([pad2(p["bmu"], 1, d_l), pad2(p["blv"], 1, d_l)], axis=1)

    prep = dict(
        w1=pad2(w1, d_in, d_h, jnp.bfloat16), s1=pad2(s1, 1, d_h),
        w2=pad2(w2, d_h, d_h, jnp.bfloat16), s2=pad2(s2, 1, d_h),
        wh=wh.astype(jnp.bfloat16), bh=bh,
        wd1=pad2(wd1, d_l, d_h, jnp.bfloat16), sd1=pad2(sd1, 1, d_h),
        wd2=pad2(wd2, d_h, d_h, jnp.bfloat16), sd2=pad2(sd2, 1, d_h),
        wd3=pad2(p["wd3"], d_h, d_in, jnp.bfloat16), bd3=pad2(p["bd3"], 1, d_in),
    )
    dims = dict(input_dim=input_dim, latent_dim=latent_dim,
                d_in=d_in, d_h=d_h, d_l=d_l)
    return prep, dims


# --------------------------------------------------------------------------
# Chip-aware sizing helpers
# --------------------------------------------------------------------------
def _vmem_capacity_bytes():
    """Per-core VMEM capacity; conservative fallbacks if introspection fails."""
    try:
        cap = int(pltpu.get_tpu_info().vmem_capacity_bytes)
        if cap > 0:
            return cap
    except Exception:
        pass
    try:
        kind = jax.devices()[0].device_kind.lower()
        if "v7" in kind:
            return 64 << 20
        return 128 << 20
    except Exception:
        return 64 << 20      # most constrained (v7x)


def _choose_block_m(n, vmem_cap, est_bytes):
    """Batch tile (multiple of 16 for bf16 sublane packing); prefer >=2 grid
    steps when the batch allows it so v7x's two TensorCores both get work."""
    if n <= 256:
        return max(SUBLANE_BF16, _round_up(n, SUBLANE_BF16))
    budget = int(0.8 * vmem_cap)
    candidates = (512, 256, 128) if vmem_cap >= (96 << 20) else (256, 128)
    for bm in candidates:
        if n >= 2 * bm and est_bytes(bm) <= budget:
            return bm
    return 128


# --------------------------------------------------------------------------
# Jitted forward (pad -> pallas_call -> slice, fused by XLA)
# --------------------------------------------------------------------------
@functools.partial(
    jax.jit,
    static_argnames=("input_dim", "latent_dim", "d_in", "d_h", "d_l",
                     "block_m", "n_pad", "vmem_limit", "single_buffer",
                     "out_dtype"))
def _vae_forward_call(x, eps, prep, *, input_dim, latent_dim, d_in, d_h, d_l,
                      block_m, n_pad, vmem_limit, single_buffer, out_dtype):
    n = x.shape[0]

    # bf16 IO; padding is a no-op when already aligned.
    x_p = x.astype(jnp.bfloat16)
    if x_p.shape != (n_pad, d_in):
        x_p = jnp.pad(x_p, ((0, n_pad - n), (0, d_in - input_dim)))
    eps_p = eps.astype(jnp.bfloat16)
    if eps_p.shape != (n_pad, d_l):
        eps_p = jnp.pad(eps_p, ((0, n_pad - n), (0, d_l - latent_dim)))

    inputs = (
        x_p, eps_p,
        prep["w1"], prep["s1"], prep["w2"], prep["s2"],
        prep["wh"], prep["bh"],
        prep["wd1"], prep["sd1"], prep["wd2"], prep["sd2"],
        prep["wd3"], prep["bd3"],
    )

    def batch_spec(cols):
        return pl.BlockSpec((block_m, cols), lambda i: (i, 0))

    if single_buffer:
        # Resident weights: block index never changes -> single-buffer them.
        def const_spec(a):
            return pl.BlockSpec(a.shape, lambda i: (0, 0),
                                pipeline_mode=pl.Buffered(1))
    else:
        def const_spec(a):
            return pl.BlockSpec(a.shape, lambda i: (0, 0))

    in_specs = [batch_spec(d_in), batch_spec(d_l)] + [const_spec(a) for a in inputs[2:]]

    out_shape = (
        jax.ShapeDtypeStruct((n_pad, d_in), out_dtype),        # recon (padded)
        jax.ShapeDtypeStruct((n_pad, 2 * d_l), jnp.float32),   # packed mu||logvar
    )
    out_specs = (batch_spec(d_in), batch_spec(2 * d_l))

    out_isz = jnp.dtype(out_dtype).itemsize
    flops = 2 * n_pad * (d_in * d_h + d_h * d_h + d_h * 2 * d_l
                         + d_l * d_h + d_h * d_h + d_h * d_in)
    bytes_accessed = (sum(int(a.size) * a.dtype.itemsize for a in inputs[2:])
                      + n_pad * d_in * 2 + n_pad * d_l * 2       # x, eps (bf16)
                      + n_pad * d_in * out_isz                   # recon
                      + n_pad * 2 * d_l * 4)                     # mu||logvar

    recon_p, mulv_p = pl.pallas_call(
        functools.partial(vae_kernel, latent_pad=d_l),
        out_shape=out_shape,
        grid=(n_pad // block_m,),
        in_specs=in_specs,
        out_specs=out_specs,
        compiler_params=pltpu.CompilerParams(
            dimension_semantics=("parallel",),
            vmem_limit_bytes=int(vmem_limit),
        ),
        cost_estimate=pl.CostEstimate(
            flops=int(flops),
            transcendentals=int(n_pad * d_l),
            bytes_accessed=int(bytes_accessed),
        ),
    )(*inputs)

    recon = recon_p[:n, :input_dim]
    mu = mulv_p[:n, :latent_dim]
    logvar = mulv_p[:n, d_l:d_l + latent_dim]
    return recon, mu, logvar


# --------------------------------------------------------------------------
# Wrapper: chip-aware tile / VMEM-budget selection, single-buffer fallback.
# --------------------------------------------------------------------------
def vae_forward(x, eps, prep, dims, out_dtype=jnp.bfloat16):
    n, input_dim = x.shape
    latent_dim = dims["latent_dim"]
    d_in, d_h, d_l = dims["d_in"], dims["d_h"], dims["d_l"]

    cap = _vmem_capacity_bytes()
    w_bytes = sum(int(a.size) * a.dtype.itemsize for a in prep.values())
    out_isz = jnp.dtype(out_dtype).itemsize

    def est(bm, weight_bufs):
        # double-buffered batch tiles + single/double-buffered weights + scratch
        io = 2 * bm * (d_in * 2 + d_l * 2 + d_in * out_isz + 2 * d_l * 4)
        act = 6 * bm * d_h * 4
        return weight_bufs * w_bytes + io + act

    block_m = _choose_block_m(n, cap, lambda bm: est(bm, 1))
    n_pad = _round_up(n, block_m)

    def limit_for(e):
        lim = max(32 << 20, int(1.25 * e) + (8 << 20))   # footprint + headroom
        return min(lim, int(0.9 * cap))                  # never the full chip VMEM

    kwargs = dict(input_dim=input_dim, latent_dim=latent_dim,
                  d_in=d_in, d_h=d_h, d_l=d_l,
                  block_m=block_m, n_pad=n_pad, out_dtype=out_dtype)
    try:
        return _vae_forward_call(x, eps, prep, single_buffer=True,
                                 vmem_limit=limit_for(est(block_m, 1)), **kwargs)
    except Exception:
        # TODO(synk): pl.Buffered(1) not supported by this jax/Mosaic version;
        # fall back to default double-buffered resident weights.
        return _vae_forward_call(x, eps, prep, single_buffer=False,
                                 vmem_limit=limit_for(est(block_m, 2)), **kwargs)


# --------------------------------------------------------------------------
# Deterministic synthetic parameters (PyTorch-like layout, pre-folding).
# Linear weights stored transposed to [in, out]; BN params/buffers as [1, F].
# --------------------------------------------------------------------------
def init_params(key, input_dim, hidden_dim, latent_dim):
    keys = jax.random.split(key, 32)
    k = iter(keys)

    def lin(in_d, out_d):
        scale = 1.0 / jnp.sqrt(in_d)
        return jax.random.uniform(next(k), (in_d, out_d), jnp.float32, -scale, scale)

    def bn(d):
        gamma = jax.random.uniform(next(k), (1, d), jnp.float32, 0.5, 1.5)
        beta = jax.random.uniform(next(k), (1, d), jnp.float32, -0.5, 0.5)
        rmean = jax.random.uniform(next(k), (1, d), jnp.float32, -0.5, 0.5)
        rvar = jax.random.uniform(next(k), (1, d), jnp.float32, 0.5, 1.5)
        return gamma, beta, rmean, rvar

    p = {}
    p["w1"] = lin(input_dim, hidden_dim)
    p["g1"], p["b1"], p["rm1"], p["rv1"] = bn(hidden_dim)
    p["w2"] = lin(hidden_dim, hidden_dim)
    p["g2"], p["b2"], p["rm2"], p["rv2"] = bn(hidden_dim)

    p["wmu"] = lin(hidden_dim, latent_dim)
    p["bmu"] = jax.random.uniform(next(k), (1, latent_dim), jnp.float32, -0.1, 0.1)
    p["wlv"] = lin(hidden_dim, latent_dim)
    p["blv"] = jax.random.uniform(next(k), (1, latent_dim), jnp.float32, -0.1, 0.1)

    p["wd1"] = lin(latent_dim, hidden_dim)
    p["gd1"], p["bd1"], p["rmd1"], p["rvd1"] = bn(hidden_dim)
    p["wd2"] = lin(hidden_dim, hidden_dim)
    p["gd2"], p["bd2"], p["rmd2"], p["rvd2"] = bn(hidden_dim)
    p["wd3"] = lin(hidden_dim, input_dim)
    p["bd3"] = jax.random.uniform(next(k), (1, input_dim), jnp.float32, -0.1, 0.1)
    return p


def vae_reference(x, eps, p):
    """Pure-JAX f32 eval-mode reference (unfolded BN, separate heads)."""
    def bn(h, g, b, rm, rv):
        return (h - rm) * jax.lax.rsqrt(rv + BN_EPS) * g + b

    def lrelu(h):
        return jnp.where(h > 0, h, LEAKY_SLOPE * h)

    h = lrelu(bn(x @ p["w1"], p["g1"], p["b1"], p["rm1"], p["rv1"]))
    h = lrelu(bn(h @ p["w2"], p["g2"], p["b2"], p["rm2"], p["rv2"]))
    mu = h @ p["wmu"] + p["bmu"]
    logvar = h @ p["wlv"] + p["blv"]
    z = mu + eps * jnp.exp(0.5 * logvar)
    d = lrelu(bn(z @ p["wd1"], p["gd1"], p["bd1"], p["rmd1"], p["rvd1"]))
    d = lrelu(bn(d @ p["wd2"], p["gd2"], p["bd2"], p["rmd2"], p["rvd2"]))
    d = d @ p["wd3"] + p["bd3"]
    return jnp.maximum(d, 0.0), mu, logvar


if __name__ == "__main__":
    # Small shapes consistent with the module's forward: x.view(-1, input_dim)
    batch = 8
    input_dim = 64
    hidden_dim = 32
    latent_dim = 16

    key = jax.random.PRNGKey(0)
    kx, keps, kp = jax.random.split(key, 3)

    x = jax.random.normal(kx, (batch, input_dim), jnp.float32)
    eps = jax.random.normal(keps, (batch, latent_dim), jnp.float32)  # randn_like(std)
    params = init_params(kp, input_dim, hidden_dim, latent_dim)
    prep, dims = prepare_params(params, input_dim, hidden_dim, latent_dim)

    recon, mu, logvar = vae_forward(x, eps, prep, dims)
    jax.block_until_ready((recon, mu, logvar))

    assert recon.shape == (batch, input_dim)
    assert mu.shape == (batch, latent_dim)
    assert logvar.shape == (batch, latent_dim)
    assert bool(jnp.all(recon >= 0.0))  # final torch.relu

    # Loose sanity check vs. pure-JAX f32 reference (kernel IO / matmuls are bf16).
    r_ref, mu_ref, lv_ref = vae_reference(x, eps, params)
    err = max(float(jnp.max(jnp.abs(recon.astype(jnp.float32) - r_ref))),
              float(jnp.max(jnp.abs(mu - mu_ref))),
              float(jnp.max(jnp.abs(logvar - lv_ref))))
    assert err < 0.25, f"bf16 kernel diverged from f32 reference: {err}"

    print("KERNEL_OK")
</pallas_src>

<mosaic_0001>
module attributes {stable_mosaic.version = 11 : i64} {
  func.func @vae_kernel(%arg0: i32, %arg1: memref<16x128xbf16, #tpu.memory_space<vmem>>, %arg2: memref<16x128xbf16, #tpu.memory_space<vmem>>, %arg3: memref<128x128xbf16, #tpu.memory_space<vmem>>, %arg4: memref<1x128xf32, #tpu.memory_space<vmem>>, %arg5: memref<128x128xbf16, #tpu.memory_space<vmem>>, %arg6: memref<1x128xf32, #tpu.memory_space<vmem>>, %arg7: memref<128x256xbf16, #tpu.memory_space<vmem>>, %arg8: memref<1x256xf32, #tpu.memory_space<vmem>>, %arg9: memref<128x128xbf16, #tpu.memory_space<vmem>>, %arg10: memref<1x128xf32, #tpu.memory_space<vmem>>, %arg11: memref<128x128xbf16, #tpu.memory_space<vmem>>, %arg12: memref<1x128xf32, #tpu.memory_space<vmem>>, %arg13: memref<128x128xbf16, #tpu.memory_space<vmem>>, %arg14: memref<1x128xf32, #tpu.memory_space<vmem>>, %arg15: memref<16x128xbf16, #tpu.memory_space<vmem>>, %arg16: memref<16x256xf32, #tpu.memory_space<vmem>>) attributes {dimension_semantics = [#tpu.dimension_semantics<parallel>], iteration_bounds = array<i64: 1>, scalar_prefetch = 0 : i64, scratch_operands = 0 : i64, tpu.core_type = #tpu.core_type<tc>, window_params = [{transform_indices = @transform_0, window_bounds = array<i64: 16, 128>}, {transform_indices = @transform_1, window_bounds = array<i64: 16, 128>}, {pipeline_mode = #tpu.pipeline_mode<synchronous>, transform_indices = @transform_2, window_bounds = array<i64: 128, 128>}, {pipeline_mode = #tpu.pipeline_mode<synchronous>, transform_indices = @transform_3, window_bounds = array<i64: 1, 128>}, {pipeline_mode = #tpu.pipeline_mode<synchronous>, transform_indices = @transform_4, window_bounds = array<i64: 128, 128>}, {pipeline_mode = #tpu.pipeline_mode<synchronous>, transform_indices = @transform_5, window_bounds = array<i64: 1, 128>}, {pipeline_mode = #tpu.pipeline_mode<synchronous>, transform_indices = @transform_6, window_bounds = array<i64: 128, 256>}, {pipeline_mode = #tpu.pipeline_mode<synchronous>, transform_indices = @transform_7, window_bounds = array<i64: 1, 256>}, {pipeline_mode = #tpu.pipeline_mode<synchronous>, transform_indices = @transform_8, window_bounds = array<i64: 128, 128>}, {pipeline_mode = #tpu.pipeline_mode<synchronous>, transform_indices = @transform_9, window_bounds = array<i64: 1, 128>}, {pipeline_mode = #tpu.pipeline_mode<synchronous>, transform_indices = @transform_10, window_bounds = array<i64: 128, 128>}, {pipeline_mode = #tpu.pipeline_mode<synchronous>, transform_indices = @transform_11, window_bounds = array<i64: 1, 128>}, {pipeline_mode = #tpu.pipeline_mode<synchronous>, transform_indices = @transform_12, window_bounds = array<i64: 128, 128>}, {pipeline_mode = #tpu.pipeline_mode<synchronous>, transform_indices = @transform_13, window_bounds = array<i64: 1, 128>}, {transform_indices = @transform_14, window_bounds = array<i64: 16, 128>}, {transform_indices = @transform_15, window_bounds = array<i64: 16, 256>}]} {
    %c0 = arith.constant 0 : index
    %c0_0 = arith.constant 0 : index
    %0 = vector.load %arg1[%c0, %c0_0] : memref<16x128xbf16, #tpu.memory_space<vmem>>, vector<16x128xbf16>
    %c0_1 = arith.constant 0 : index
    %c0_2 = arith.constant 0 : index
    %1 = vector.load %arg3[%c0_1, %c0_2] : memref<128x128xbf16, #tpu.memory_space<vmem>>, vector<128x128xbf16>
    %cst = arith.constant dense<0.000000e+00> : vector<16x128xf32>
    %2 = tpu.matmul %0, %1, %cst {dimension_numbers = #tpu.dot_dimension_numbers<[1], [0], [0], [1], [0, 0, 1, 1], [], []>} : vector<16x128xbf16>, vector<128x128xbf16>, vector<16x128xf32> -> vector<16x128xf32>
    %c0_3 = arith.constant 0 : index
    %c0_4 = arith.constant 0 : index
    %3 = vector.load %arg4[%c0_3, %c0_4] : memref<1x128xf32, #tpu.memory_space<vmem>>, vector<1x128xf32>
    %4 = vector.broadcast %3 : vector<1x128xf32> to vector<16x128xf32>
    %5 = arith.addf %2, %4 : vector<16x128xf32>
    %cst_5 = arith.constant 0.00999999977 : f32
    %6 = vector.broadcast %cst_5 : f32 to vector<16x128xf32>
    %7 = arith.mulf %6, %5 : vector<16x128xf32>
    %8 = arith.maximumf %5, %7 : vector<16x128xf32>
    %9 = arith.truncf %8 : vector<16x128xf32> to vector<16x128xbf16>
    %c0_6 = arith.constant 0 : index
    %c0_7 = arith.constant 0 : index
    %10 = vector.load %arg5[%c0_6, %c0_7] : memref<128x128xbf16, #tpu.memory_space<vmem>>, vector<128x128xbf16>
    %cst_8 = arith.constant dense<0.000000e+00> : vector<16x128xf32>
    %11 = tpu.matmul %9, %10, %cst_8 {dimension_numbers = #tpu.dot_dimension_numbers<[1], [0], [0], [1], [0, 0, 1, 1], [], []>} : vector<16x128xbf16>, vector<128x128xbf16>, vector<16x128xf32> -> vector<16x128xf32>
    %c0_9 = arith.constant 0 : index
    %c0_10 = arith.constant 0 : index
    %12 = vector.load %arg6[%c0_9, %c0_10] : memref<1x128xf32, #tpu.memory_space<vmem>>, vector<1x128xf32>
    %13 = vector.broadcast %12 : vector<1x128xf32> to vector<16x128xf32>
    %14 = arith.addf %11, %13 : vector<16x128xf32>
    %cst_11 = arith.constant 0.00999999977 : f32
    %15 = vector.broadcast %cst_11 : f32 to vector<16x128xf32>
    %16 = arith.mulf %15, %14 : vector<16x128xf32>
    %17 = arith.maximumf %14, %16 : vector<16x128xf32>
    %18 = arith.truncf %17 : vector<16x128xf32> to vector<16x128xbf16>
    %c0_12 = arith.constant 0 : index
    %c0_13 = arith.constant 0 : index
    %19 = vector.load %arg7[%c0_12, %c0_13] : memref<128x256xbf16, #tpu.memory_space<vmem>>, vector<128x256xbf16>
    %cst_14 = arith.constant dense<0.000000e+00> : vector<16x256xf32>
    %20 = tpu.matmul %18, %19, %cst_14 {dimension_numbers = #tpu.dot_dimension_numbers<[1], [0], [0], [1], [0, 0, 1, 1], [], []>} : vector<16x128xbf16>, vector<128x256xbf16>, vector<16x256xf32> -> vector<16x256xf32>
    %c0_15 = arith.constant 0 : index
    %c0_16 = arith.constant 0 : index
    %21 = vector.load %arg8[%c0_15, %c0_16] : memref<1x256xf32, #tpu.memory_space<vmem>>, vector<1x256xf32>
    %22 = vector.broadcast %21 : vector<1x256xf32> to vector<16x256xf32>
    %23 = arith.addf %20, %22 : vector<16x256xf32>
    %24 = vector.extract_strided_slice %23 {offsets = [0, 0], sizes = [16, 128], strides = [1, 1]} : vector<16x256xf32> to vector<16x128xf32>
    %25 = vector.extract_strided_slice %23 {offsets = [0, 128], sizes = [16, 128], strides = [1, 1]} : vector<16x256xf32> to vector<16x128xf32>
    %c0_17 = arith.constant 0 : index
    %c0_18 = arith.constant 0 : index
    %26 = vector.load %arg2[%c0_17, %c0_18] : memref<16x128xbf16, #tpu.memory_space<vmem>>, vector<16x128xbf16>
    %27 = arith.extf %26 : vector<16x128xbf16> to vector<16x128xf32>
    %cst_19 = arith.constant 5.000000e-01 : f32
    %28 = vector.broadcast %cst_19 : f32 to vector<16x128xf32>
    %29 = arith.mulf %28, %25 : vector<16x128xf32>
    %30 = math.exp %29 : vector<16x128xf32>
    %31 = arith.mulf %27, %30 : vector<16x128xf32>
    %32 = arith.addf %24, %31 : vector<16x128xf32>
    %33 = arith.truncf %32 : vector<16x128xf32> to vector<16x128xbf16>
    %c0_20 = arith.constant 0 : index
    %c0_21 = arith.constant 0 : index
    %34 = vector.load %arg9[%c0_20, %c0_21] : memref<128x128xbf16, #tpu.memory_space<vmem>>, vector<128x128xbf16>
    %cst_22 = arith.constant dense<0.000000e+00> : vector<16x128xf32>
    %35 = tpu.matmul %33, %34, %cst_22 {dimension_numbers = #tpu.dot_dimension_numbers<[1], [0], [0], [1], [0, 0, 1, 1], [], []>} : vector<16x128xbf16>, vector<128x128xbf16>, vector<16x128xf32> -> vector<16x128xf32>
    %c0_23 = arith.constant 0 : index
    %c0_24 = arith.constant 0 : index
    %36 = vector.load %arg10[%c0_23, %c0_24] : memref<1x128xf32, #tpu.memory_space<vmem>>, vector<1x128xf32>
    %37 = vector.broadcast %36 : vector<1x128xf32> to vector<16x128xf32>
    %38 = arith.addf %35, %37 : vector<16x128xf32>
    %cst_25 = arith.constant 0.00999999977 : f32
    %39 = vector.broadcast %cst_25 : f32 to vector<16x128xf32>
    %40 = arith.mulf %39, %38 : vector<16x128xf32>
    %41 = arith.maximumf %38, %40 : vector<16x128xf32>
    %42 = arith.truncf %41 : vector<16x128xf32> to vector<16x128xbf16>
    %c0_26 = arith.constant 0 : index
    %c0_27 = arith.constant 0 : index
    %43 = vector.load %arg11[%c0_26, %c0_27] : memref<128x128xbf16, #tpu.memory_space<vmem>>, vector<128x128xbf16>
    %cst_28 = arith.constant dense<0.000000e+00> : vector<16x128xf32>
    %44 = tpu.matmul %42, %43, %cst_28 {dimension_numbers = #tpu.dot_dimension_numbers<[1], [0], [0], [1], [0, 0, 1, 1], [], []>} : vector<16x128xbf16>, vector<128x128xbf16>, vector<16x128xf32> -> vector<16x128xf32>
    %c0_29 = arith.constant 0 : index
    %c0_30 = arith.constant 0 : index
    %45 = vector.load %arg12[%c0_29, %c0_30] : memref<1x128xf32, #tpu.memory_space<vmem>>, vector<1x128xf32>
    %46 = vector.broadcast %45 : vector<1x128xf32> to vector<16x128xf32>
    %47 = arith.addf %44, %46 : vector<16x128xf32>
    %cst_31 = arith.constant 0.00999999977 : f32
    %48 = vector.broadcast %cst_31 : f32 to vector<16x128xf32>
    %49 = arith.mulf %48, %47 : vector<16x128xf32>
    %50 = arith.maximumf %47, %49 : vector<16x128xf32>
    %51 = arith.truncf %50 : vector<16x128xf32> to vector<16x128xbf16>
    %c0_32 = arith.constant 0 : index
    %c0_33 = arith.constant 0 : index
    %52 = vector.load %arg13[%c0_32, %c0_33] : memref<128x128xbf16, #tpu.memory_space<vmem>>, vector<128x128xbf16>
    %cst_34 = arith.constant dense<0.000000e+00> : vector<16x128xf32>
    %53 = tpu.matmul %51, %52, %cst_34 {dimension_numbers = #tpu.dot_dimension_numbers<[1], [0], [0], [1], [0, 0, 1, 1], [], []>} : vector<16x128xbf16>, vector<128x128xbf16>, vector<16x128xf32> -> vector<16x128xf32>
    %c0_35 = arith.constant 0 : index
    %c0_36 = arith.constant 0 : index
    %54 = vector.load %arg14[%c0_35, %c0_36] : memref<1x128xf32, #tpu.memory_space<vmem>>, vector<1x128xf32>
    %55 = vector.broadcast %54 : vector<1x128xf32> to vector<16x128xf32>
    %56 = arith.addf %53, %55 : vector<16x128xf32>
    %cst_37 = arith.constant 0.000000e+00 : f32
    %57 = vector.broadcast %cst_37 : f32 to vector<16x128xf32>
    %58 = arith.maximumf %56, %57 : vector<16x128xf32>
    %59 = arith.truncf %58 : vector<16x128xf32> to vector<16x128xbf16>
    %c0_38 = arith.constant 0 : index
    %c0_39 = arith.constant 0 : index
    %60 = vector.load %arg15[%c0_38, %c0_39] : memref<16x128xbf16, #tpu.memory_space<vmem>>, vector<16x128xbf16>
    tpu.vector_store %arg15[%c0_38, %c0_39], %59 {strides = array<i32>} : memref<16x128xbf16, #tpu.memory_space<vmem>>, vector<16x128xbf16>,
    %c0_40 = arith.constant 0 : index
    %c0_41 = arith.constant 0 : index
    %61 = vector.load %arg16[%c0_40, %c0_41] : memref<16x256xf32, #tpu.memory_space<vmem>>, vector<16x256xf32>
    tpu.vector_store %arg16[%c0_40, %c0_41], %23 {strides = array<i32>} : memref<16x256xf32, #tpu.memory_space<vmem>>, vector<16x256xf32>,
    return
  }
  func.func @transform_0(%arg0: i32) -> (i32, i32) {
    %c0_i32 = arith.constant 0 : i32
    %c0_i32_0 = arith.constant 0 : i32
    return %arg0, %c0_i32 : i32, i32
  }
  func.func @transform_1(%arg0: i32) -> (i32, i32) {
    %c0_i32 = arith.constant 0 : i32
    %c0_i32_0 = arith.constant 0 : i32
    return %arg0, %c0_i32 : i32, i32
  }
  func.func @transform_2(%arg0: i32) -> (i32, i32) {
    %c0_i32 = arith.constant 0 : i32
    %c0_i32_0 = arith.constant 0 : i32
    %c0_i32_1 = arith.constant 0 : i32
    return %c0_i32, %c0_i32_0 : i32, i32
  }
  func.func @transform_3(%arg0: i32) -> (i32, i32) {
    %c0_i32 = arith.constant 0 : i32
    %c0_i32_0 = arith.constant 0 : i32
    %c0_i32_1 = arith.constant 0 : i32
    return %c0_i32, %c0_i32_0 : i32, i32
  }
  func.func @transform_4(%arg0: i32) -> (i32, i32) {
    %c0_i32 = arith.constant 0 : i32
    %c0_i32_0 = arith.constant 0 : i32
    %c0_i32_1 = arith.constant 0 : i32
    return %c0_i32, %c0_i32_0 : i32, i32
  }
  func.func @transform_5(%arg0: i32) -> (i32, i32) {
    %c0_i32 = arith.constant 0 : i32
    %c0_i32_0 = arith.constant 0 : i32
    %c0_i32_1 = arith.constant 0 : i32
    return %c0_i32, %c0_i32_0 : i32, i32
  }
  func.func @transform_6(%arg0: i32) -> (i32, i32) {
    %c0_i32 = arith.constant 0 : i32
    %c0_i32_0 = arith.constant 0 : i32
    %c0_i32_1 = arith.constant 0 : i32
    return %c0_i32, %c0_i32_0 : i32, i32
  }
  func.func @transform_7(%arg0: i32) -> (i32, i32) {
    %c0_i32 = arith.constant 0 : i32
    %c0_i32_0 = arith.constant 0 : i32
    %c0_i32_1 = arith.constant 0 : i32
    return %c0_i32, %c0_i32_0 : i32, i32
  }
  func.func @transform_8(%arg0: i32) -> (i32, i32) {
    %c0_i32 = arith.constant 0 : i32
    %c0_i32_0 = arith.constant 0 : i32
    %c0_i32_1 = arith.constant 0 : i32
    return %c0_i32, %c0_i32_0 : i32, i32
  }
  func.func @transform_9(%arg0: i32) -> (i32, i32) {
    %c0_i32 = arith.constant 0 : i32
    %c0_i32_0 = arith.constant 0 : i32
    %c0_i32_1 = arith.constant 0 : i32
    return %c0_i32, %c0_i32_0 : i32, i32
  }
  func.func @transform_10(%arg0: i32) -> (i32, i32) {
    %c0_i32 = arith.constant 0 : i32
    %c0_i32_0 = arith.constant 0 : i32
    %c0_i32_1 = arith.constant 0 : i32
    return %c0_i32, %c0_i32_0 : i32, i32
  }
  func.func @transform_11(%arg0: i32) -> (i32, i32) {
    %c0_i32 = arith.constant 0 : i32
    %c0_i32_0 = arith.constant 0 : i32
    %c0_i32_1 = arith.constant 0 : i32
    return %c0_i32, %c0_i32_0 : i32, i32
  }
  func.func @transform_12(%arg0: i32) -> (i32, i32) {
    %c0_i32 = arith.constant 0 : i32
    %c0_i32_0 = arith.constant 0 : i32
    %c0_i32_1 = arith.constant 0 : i32
    return %c0_i32, %c0_i32_0 : i32, i32
  }
  func.func @transform_13(%arg0: i32) -> (i32, i32) {
    %c0_i32 = arith.constant 0 : i32
    %c0_i32_0 = arith.constant 0 : i32
    %c0_i32_1 = arith.constant 0 : i32
    return %c0_i32, %c0_i32_0 : i32, i32
  }
  func.func @transform_14(%arg0: i32) -> (i32, i32) {
    %c0_i32 = arith.constant 0 : i32
    %c0_i32_0 = arith.constant 0 : i32
    return %arg0, %c0_i32 : i32, i32
  }
  func.func @transform_15(%arg0: i32) -> (i32, i32) {
    %c0_i32 = arith.constant 0 : i32
    %c0_i32_0 = arith.constant 0 : i32
    return %arg0, %c0_i32 : i32, i32
  }
}

module attributes {stable_mosaic.version = 11 : i64} {
  func.func @vae_kernel(%arg0: i32, %arg1: memref<16x128xbf16, #tpu.memory_space<vmem>>, %arg2: memref<16x128xbf16, #tpu.memory_space<vmem>>, %arg3: memref<128x128xbf16, #tpu.memory_space<vmem>>, %arg4: memref<1x128xf32, #tpu.memory_space<vmem>>, %arg5: memref<128x128xbf16, #tpu.memory_space<vmem>>, %arg6: memref<1x128xf32, #tpu.memory_space<vmem>>, %arg7: memref<128x256xbf16, #tpu.memory_space<vmem>>, %arg8: memref<1x256xf32, #tpu.memory_space<vmem>>, %arg9: memref<128x128xbf16, #tpu.memory_space<vmem>>, %arg10: memref<1x128xf32, #tpu.memory_space<vmem>>, %arg11: memref<128x128xbf16, #tpu.memory_space<vmem>>, %arg12: memref<1x128xf32, #tpu.memory_space<vmem>>, %arg13: memref<128x128xbf16, #tpu.memory_space<vmem>>, %arg14: memref<1x128xf32, #tpu.memory_space<vmem>>, %arg15: memref<16x128xbf16, #tpu.memory_space<vmem>>, %arg16: memref<16x256xf32, #tpu.memory_space<vmem>>) attributes {dimension_semantics = [#tpu.dimension_semantics<parallel>], iteration_bounds = array<i64: 1>, scalar_prefetch = 0 : i64, scratch_operands = 0 : i64, tpu.core_type = #tpu.core_type<tc>, window_params = [{transform_indices = @transform_0, window_bounds = array<i64: 16, 128>}, {transform_indices = @transform_1, window_bounds = array<i64: 16, 128>}, {pipeline_mode = #tpu.pipeline_mode<synchronous>, transform_indices = @transform_2, window_bounds = array<i64: 128, 128>}, {pipeline_mode = #tpu.pipeline_mode<synchronous>, transform_indices = @transform_3, window_bounds = array<i64: 1, 128>}, {pipeline_mode = #tpu.pipeline_mode<synchronous>, transform_indices = @transform_4, window_bounds = array<i64: 128, 128>}, {pipeline_mode = #tpu.pipeline_mode<synchronous>, transform_indices = @transform_5, window_bounds = array<i64: 1, 128>}, {pipeline_mode = #tpu.pipeline_mode<synchronous>, transform_indices = @transform_6, window_bounds = array<i64: 128, 256>}, {pipeline_mode = #tpu.pipeline_mode<synchronous>, transform_indices = @transform_7, window_bounds = array<i64: 1, 256>}, {pipeline_mode = #tpu.pipeline_mode<synchronous>, transform_indices = @transform_8, window_bounds = array<i64: 128, 128>}, {pipeline_mode = #tpu.pipeline_mode<synchronous>, transform_indices = @transform_9, window_bounds = array<i64: 1, 128>}, {pipeline_mode = #tpu.pipeline_mode<synchronous>, transform_indices = @transform_10, window_bounds = array<i64: 128, 128>}, {pipeline_mode = #tpu.pipeline_mode<synchronous>, transform_indices = @transform_11, window_bounds = array<i64: 1, 128>}, {pipeline_mode = #tpu.pipeline_mode<synchronous>, transform_indices = @transform_12, window_bounds = array<i64: 128, 128>}, {pipeline_mode = #tpu.pipeline_mode<synchronous>, transform_indices = @transform_13, window_bounds = array<i64: 1, 128>}, {transform_indices = @transform_14, window_bounds = array<i64: 16, 128>}, {transform_indices = @transform_15, window_bounds = array<i64: 16, 256>}]} {
    %c0 = arith.constant 0 : index
    %c0_0 = arith.constant 0 : index
    %0 = vector.load %arg1[%c0, %c0_0] : memref<16x128xbf16, #tpu.memory_space<vmem>>, vector<16x128xbf16>
    %c0_1 = arith.constant 0 : index
    %c0_2 = arith.constant 0 : index
    %1 = vector.load %arg3[%c0_1, %c0_2] : memref<128x128xbf16, #tpu.memory_space<vmem>>, vector<128x128xbf16>
    %cst = arith.constant dense<0.000000e+00> : vector<16x128xf32>
    %2 = tpu.matmul %0, %1, %cst {dimension_numbers = #tpu.dot_dimension_numbers<[1], [0], [0], [1], [0, 0, 1, 1], [], []>} : vector<16x128xbf16>, vector<128x128xbf16>, vector<16x128xf32> -> vector<16x128xf32>
    %c0_3 = arith.constant 0 : index
    %c0_4 = arith.constant 0 : index
    %3 = vector.load %arg4[%c0_3, %c0_4] : memref<1x128xf32, #tpu.memory_space<vmem>>, vector<1x128xf32>
    %4 = vector.broadcast %3 : vector<1x128xf32> to vector<16x128xf32>
    %5 = arith.addf %2, %4 : vector<16x128xf32>
    %cst_5 = arith.constant 0.00999999977 : f32
    %6 = vector.broadcast %cst_5 : f32 to vector<16x128xf32>
    %7 = arith.mulf %6, %5 : vector<16x128xf32>
    %8 = arith.maximumf %5, %7 : vector<16x128xf32>
    %9 = arith.truncf %8 : vector<16x128xf32> to vector<16x128xbf16>
    %c0_6 = arith.constant 0 : index
    %c0_7 = arith.constant 0 : index
    %10 = vector.load %arg5[%c0_6, %c0_7] : memref<128x128xbf16, #tpu.memory_space<vmem>>, vector<128x128xbf16>
    %cst_8 = arith.constant dense<0.000000e+00> : vector<16x128xf32>
    %11 = tpu.matmul %9, %10, %cst_8 {dimension_numbers = #tpu.dot_dimension_numbers<[1], [0], [0], [1], [0, 0, 1, 1], [], []>} : vector<16x128xbf16>, vector<128x128xbf16>, vector<16x128xf32> -> vector<16x128xf32>
    %c0_9 = arith.constant 0 : index
    %c0_10 = arith.constant 0 : index
    %12 = vector.load %arg6[%c0_9, %c0_10] : memref<1x128xf32, #tpu.memory_space<vmem>>, vector<1x128xf32>
    %13 = vector.broadcast %12 : vector<1x128xf32> to vector<16x128xf32>
    %14 = arith.addf %11, %13 : vector<16x128xf32>
    %cst_11 = arith.constant 0.00999999977 : f32
    %15 = vector.broadcast %cst_11 : f32 to vector<16x128xf32>
    %16 = arith.mulf %15, %14 : vector<16x128xf32>
    %17 = arith.maximumf %14, %16 : vector<16x128xf32>
    %18 = arith.truncf %17 : vector<16x128xf32> to vector<16x128xbf16>
    %c0_12 = arith.constant 0 : index
    %c0_13 = arith.constant 0 : index
    %19 = vector.load %arg7[%c0_12, %c0_13] : memref<128x256xbf16, #tpu.memory_space<vmem>>, vector<128x256xbf16>
    %cst_14 = arith.constant dense<0.000000e+00> : vector<16x256xf32>
    %20 = tpu.matmul %18, %19, %cst_14 {dimension_numbers = #tpu.dot_dimension_numbers<[1], [0], [0], [1], [0, 0, 1, 1], [], []>} : vector<16x128xbf16>, vector<128x256xbf16>, vector<16x256xf32> -> vector<16x256xf32>
    %c0_15 = arith.constant 0 : index
    %c0_16 = arith.constant 0 : index
    %21 = vector.load %arg8[%c0_15, %c0_16] : memref<1x256xf32, #tpu.memory_space<vmem>>, vector<1x256xf32>
    %22 = vector.broadcast %21 : vector<1x256xf32> to vector<16x256xf32>
    %23 = arith.addf %20, %22 : vector<16x256xf32>
    %24 = vector.extract_strided_slice %23 {offsets = [0, 0], sizes = [16, 128], strides = [1, 1]} : vector<16x256xf32> to vector<16x128xf32>
    %25 = vector.extract_strided_slice %23 {offsets = [0, 128], sizes = [16, 128], strides = [1, 1]} : vector<16x256xf32> to vector<16x128xf32>
    %c0_17 = arith.constant 0 : index
    %c0_18 = arith.constant 0 : index
    %26 = vector.load %arg2[%c0_17, %c0_18] : memref<16x128xbf16, #tpu.memory_space<vmem>>, vector<16x128xbf16>
    %27 = arith.extf %26 : vector<16x128xbf16> to vector<16x128xf32>
    %cst_19 = arith.constant 5.000000e-01 : f32
    %28 = vector.broadcast %cst_19 : f32 to vector<16x128xf32>
    %29 = arith.mulf %28, %25 : vector<16x128xf32>
    %30 = math.exp %29 : vector<16x128xf32>
    %31 = arith.mulf %27, %30 : vector<16x128xf32>
    %32 = arith.addf %24, %31 : vector<16x128xf32>
    %33 = arith.truncf %32 : vector<16x128xf32> to vector<16x128xbf16>
    %c0_20 = arith.constant 0 : index
    %c0_21 = arith.constant 0 : index
    %34 = vector.load %arg9[%c0_20, %c0_21] : memref<128x128xbf16, #tpu.memory_space<vmem>>, vector<128x128xbf16>
    %cst_22 = arith.constant dense<0.000000e+00> : vector<16x128xf32>
    %35 = tpu.matmul %33, %34, %cst_22 {dimension_numbers = #tpu.dot_dimension_numbers<[1], [0], [0], [1], [0, 0, 1, 1], [], []>} : vector<16x128xbf16>, vector<128x128xbf16>, vector<16x128xf32> -> vector<16x128xf32>
    %c0_23 = arith.constant 0 : index
    %c0_24 = arith.constant 0 : index
    %36 = vector.load %arg10[%c0_23, %c0_24] : memref<1x128xf32, #tpu.memory_space<vmem>>, vector<1x128xf32>
    %37 = vector.broadcast %36 : vector<1x128xf32> to vector<16x128xf32>
    %38 = arith.addf %35, %37 : vector<16x128xf32>
    %cst_25 = arith.constant 0.00999999977 : f32
    %39 = vector.broadcast %cst_25 : f32 to vector<16x128xf32>
    %40 = arith.mulf %39, %38 : vector<16x128xf32>
    %41 = arith.maximumf %38, %40 : vector<16x128xf32>
    %42 = arith.truncf %41 : vector<16x128xf32> to vector<16x128xbf16>
    %c0_26 = arith.constant 0 : index
    %c0_27 = arith.constant 0 : index
    %43 = vector.load %arg11[%c0_26, %c0_27] : memref<128x128xbf16, #tpu.memory_space<vmem>>, vector<128x128xbf16>
    %cst_28 = arith.constant dense<0.000000e+00> : vector<16x128xf32>
    %44 = tpu.matmul %42, %43, %cst_28 {dimension_numbers = #tpu.dot_dimension_numbers<[1], [0], [0], [1], [0, 0, 1, 1], [], []>} : vector<16x128xbf16>, vector<128x128xbf16>, vector<16x128xf32> -> vector<16x128xf32>
    %c0_29 = arith.constant 0 : index
    %c0_30 = arith.constant 0 : index
    %45 = vector.load %arg12[%c0_29, %c0_30] : memref<1x128xf32, #tpu.memory_space<vmem>>, vector<1x128xf32>
    %46 = vector.broadcast %45 : vector<1x128xf32> to vector<16x128xf32>
    %47 = arith.addf %44, %46 : vector<16x128xf32>
    %cst_31 = arith.constant 0.00999999977 : f32
    %48 = vector.broadcast %cst_31 : f32 to vector<16x128xf32>
    %49 = arith.mulf %48, %47 : vector<16x128xf32>
    %50 = arith.maximumf %47, %49 : vector<16x128xf32>
    %51 = arith.truncf %50 : vector<16x128xf32> to vector<16x128xbf16>
    %c0_32 = arith.constant 0 : index
    %c0_33 = arith.constant 0 : index
    %52 = vector.load %arg13[%c0_32, %c0_33] : memref<128x128xbf16, #tpu.memory_space<vmem>>, vector<128x128xbf16>
    %cst_34 = arith.constant dense<0.000000e+00> : vector<16x128xf32>
    %53 = tpu.matmul %51, %52, %cst_34 {dimension_numbers = #tpu.dot_dimension_numbers<[1], [0], [0], [1], [0, 0, 1, 1], [], []>} : vector<16x128xbf16>, vector<128x128xbf16>, vector<16x128xf32> -> vector<16x128xf32>
    %c0_35 = arith.constant 0 : index
    %c0_36 = arith.constant 0 : index
    %54 = vector.load %arg14[%c0_35, %c0_36] : memref<1x128xf32, #tpu.memory_space<vmem>>, vector<1x128xf32>
    %55 = vector.broadcast %54 : vector<1x128xf32> to vector<16x128xf32>
    %56 = arith.addf %53, %55 : vector<16x128xf32>
    %cst_37 = arith.constant 0.000000e+00 : f32
    %57 = vector.broadcast %cst_37 : f32 to vector<16x128xf32>
    %58 = arith.maximumf %56, %57 : vector<16x128xf32>
    %59 = arith.truncf %58 : vector<16x128xf32> to vector<16x128xbf16>
    %c0_38 = arith.constant 0 : index
    %c0_39 = arith.constant 0 : index
    %60 = vector.load %arg15[%c0_38, %c0_39] : memref<16x128xbf16, #tpu.memory_space<vmem>>, vector<16x128xbf16>
    tpu.vector_store %arg15[%c0_38, %c0_39], %59 {strides = array<i32>} : memref<16x128xbf16, #tpu.memory_space<vmem>>, vector<16x128xbf16>,
    %c0_40 = arith.constant 0 : index
    %c0_41 = arith.constant 0 : index
    %61 = vector.load %arg16[%c0_40, %c0_41] : memref<16x256xf32, #tpu.memory_space<vmem>>, vector<16x256xf32>
    tpu.vector_store %arg16[%c0_40, %c0_41], %23 {strides = array<i32>} : memref<16x256xf32, #tpu.memory_space<vmem>>, vector<16x256xf32>,
    return
  }
  func.func @transform_0(%arg0: i32) -> (i32, i32) {
    %c0_i32 = arith.constant 0 : i32
    %c0_i32_0 = arith.constant 0 : i32
    return %arg0, %c0_i32 : i32, i32
  }
  func.func @transform_1(%arg0: i32) -> (i32, i32) {
    %c0_i32 = arith.constant 0 : i32
    %c0_i32_0 = arith.constant 0 : i32
    return %arg0, %c0_i32 : i32, i32
  }
  func.func @transform_2(%arg0: i32) -> (i32, i32) {
    %c0_i32 = arith.constant 0 : i32
    %c0_i32_0 = arith.constant 0 : i32
    %c0_i32_1 = arith.constant 0 : i32
    return %c0_i32, %c0_i32_0 : i32, i32
  }
  func.func @transform_3(%arg0: i32) -> (i32, i32) {
    %c0_i32 = arith.constant 0 : i32
    %c0_i32_0 = arith.constant 0 : i32
    %c0_i32_1 = arith.constant 0 : i32
    return %c0_i32, %c0_i32_0 : i32, i32
  }
  func.func @transform_4(%arg0: i32) -> (i32, i32) {
    %c0_i32 = arith.constant 0 : i32
    %c0_i32_0 = arith.constant 0 : i32
    %c0_i32_1 = arith.constant 0 : i32
    return %c0_i32, %c0_i32_0 : i32, i32
  }
  func.func @transform_5(%arg0: i32) -> (i32, i32) {
    %c0_i32 = arith.constant 0 : i32
    %c0_i32_0 = arith.constant 0 : i32
    %c0_i32_1 = arith.constant 0 : i32
    return %c0_i32, %c0_i32_0 : i32, i32
  }
  func.func @transform_6(%arg0: i32) -> (i32, i32) {
    %c0_i32 = arith.constant 0 : i32
    %c0_i32_0 = arith.constant 0 : i32
    %c0_i32_1 = arith.constant 0 : i32
    return %c0_i32, %c0_i32_0 : i32, i32
  }
  func.func @transform_7(%arg0: i32) -> (i32, i32) {
    %c0_i32 = arith.constant 0 : i32
    %c0_i32_0 = arith.constant 0 : i32
    %c0_i32_1 = arith.constant 0 : i32
    return %c0_i32, %c0_i32_0 : i32, i32
  }
  func.func @transform_8(%arg0: i32) -> (i32, i32) {
    %c0_i32 = arith.constant 0 : i32
    %c0_i32_0 = arith.constant 0 : i32
    %c0_i32_1 = arith.constant 0 : i32
    return %c0_i32, %c0_i32_0 : i32, i32
  }
  func.func @transform_9(%arg0: i32) -> (i32, i32) {
    %c0_i32 = arith.constant 0 : i32
    %c0_i32_0 = arith.constant 0 : i32
    %c0_i32_1 = arith.constant 0 : i32
    return %c0_i32, %c0_i32_0 : i32, i32
  }
  func.func @transform_10(%arg0: i32) -> (i32, i32) {
    %c0_i32 = arith.constant 0 : i32
    %c0_i32_0 = arith.constant 0 : i32
    %c0_i32_1 = arith.constant 0 : i32
    return %c0_i32, %c0_i32_0 : i32, i32
  }
  func.func @transform_11(%arg0: i32) -> (i32, i32) {
    %c0_i32 = arith.constant 0 : i32
    %c0_i32_0 = arith.constant 0 : i32
    %c0_i32_1 = arith.constant 0 : i32
    return %c0_i32, %c0_i32_0 : i32, i32
  }
  func.func @transform_12(%arg0: i32) -> (i32, i32) {
    %c0_i32 = arith.constant 0 : i32
    %c0_i32_0 = arith.constant 0 : i32
    %c0_i32_1 = arith.constant 0 : i32
    return %c0_i32, %c0_i32_0 : i32, i32
  }
  func.func @transform_13(%arg0: i32) -> (i32, i32) {
    %c0_i32 = arith.constant 0 : i32
    %c0_i32_0 = arith.constant 0 : i32
    %c0_i32_1 = arith.constant 0 : i32
    return %c0_i32, %c0_i32_0 : i32, i32
  }
  func.func @transform_14(%arg0: i32) -> (i32, i32) {
    %c0_i32 = arith.constant 0 : i32
    %c0_i32_0 = arith.constant 0 : i32
    return %arg0, %c0_i32 : i32, i32
  }
  func.func @transform_15(%arg0: i32) -> (i32, i32) {
    %c0_i32 = arith.constant 0 : i32
    %c0_i32_0 = arith.constant 0 : i32
    return %arg0, %c0_i32 : i32, i32
  }
}

</mosaic_0001>

<llo_original>
// kernel: _vae_forward_call.1
$region0: #{_vae_forward_call.1}
  #allocation0 [shape = 'u32[]', space=smem, size = 0x4, offset = 0x4, fixed_abs, tag = 'smem constant byte address 0x4 - core index']
  #allocation1 [shape = 'u32[144,128]{1,0:T(1,128)}', space=vmem, size = 0x12000, scoped, tag = 'internal scratch']
  %s0 = inlined_call_operand.vmem [shape: bf16[16,128], index: 0, kind: input, shape index: {}]
  %s1 = inlined_call_operand.vmem [shape: bf16[16,128], index: 1, kind: input, shape index: {}]
  %s2 = inlined_call_operand.vmem [shape: bf16[128,128], index: 2, kind: input, shape index: {}]
  %s3 = inlined_call_operand.hbm [shape: f32[1,128], index: 3, kind: input, shape index: {}]
  %s4 = inlined_call_operand.hbm [shape: bf16[128,128], index: 4, kind: input, shape index: {}]
  %s5 = inlined_call_operand.hbm [shape: f32[1,128], index: 5, kind: input, shape index: {}]
  %s6 = inlined_call_operand.hbm [shape: bf16[128,256], index: 6, kind: input, shape index: {}]
  %s7 = inlined_call_operand.hbm [shape: f32[1,256], index: 7, kind: input, shape index: {}]
  %s8 = inlined_call_operand.hbm [shape: bf16[128,128], index: 8, kind: input, shape index: {}]
  %s9 = inlined_call_operand.hbm [shape: f32[1,128], index: 9, kind: input, shape index: {}]
  %s10 = inlined_call_operand.hbm [shape: bf16[128,128], index: 10, kind: input, shape index: {}]
  %s11 = inlined_call_operand.hbm [shape: f32[1,128], index: 11, kind: input, shape index: {}]
  %s12 = inlined_call_operand.hbm [shape: bf16[128,128], index: 12, kind: input, shape index: {}]
  %s13 = inlined_call_operand.hbm [shape: f32[1,128], index: 13, kind: input, shape index: {}]
  %s14 = inlined_call_operand.vmem [shape: bf16[16,128], index: 14, kind: output, shape index: {0}]
  %s15 = inlined_call_operand.vmem [shape: f32[16,256], index: 15, kind: output, shape index: {1}]
  %16 = xla_tuple %s14, %s15
  %s17 = sld [smem:[#allocation0]]
  $region118: #{_vae_forward_call.1} parent=0
    _
  %s19 = ssub.s32 1, %s17
  %s20 = scalar_select 0, %s19, %s17
  $region1: #{_vae_forward_call.1} parent=0
    #allocation2 [shape = 'u8[512]{0}', space=vmem, size = 0x400, scoped, tag = 'input window, operand 3, single buffered']
    #allocation3 [shape = 's32[1]{0}', space=sflag, size = 0x4, scoped, tag = 'scoped memory for _vae_forward_call.1']
    #allocation4 [shape = 'u8[32768]{0}', space=vmem, size = 0x8000, scoped, tag = 'input window, operand 4, single buffered']
    #allocation5 [shape = 's32[1]{0}', space=sflag, size = 0x4, scoped, tag = 'scoped memory for _vae_forward_call.1']
    #allocation6 [shape = 'u8[512]{0}', space=vmem, size = 0x400, scoped, tag = 'input window, operand 5, single buffered']
    #allocation7 [shape = 'u8[65536]{0}', space=vmem, size = 0x10000, scoped, tag = 'input window, operand 6, single buffered']
    #allocation8 [shape = 's32[1]{0}', space=sflag, size = 0x4, scoped, tag = 'scoped memory for _vae_forward_call.1']
    #allocation9 [shape = 'u8[1024]{0}', space=vmem, size = 0x400, scoped, tag = 'input window, operand 7, single buffered']
    #allocation10 [shape = 'u8[32768]{0}', space=vmem, size = 0x8000, scoped, tag = 'input window, operand 8, single buffered']
    #allocation11 [shape = 's32[1]{0}', space=sflag, size = 0x4, scoped, tag = 'scoped memory for _vae_forward_call.1']
    #allocation12 [shape = 'u8[512]{0}', space=vmem, size = 0x400, scoped, tag = 'input window, operand 9, single buffered']
    #allocation13 [shape = 'u8[32768]{0}', space=vmem, size = 0x8000, scoped, tag = 'input window, operand 10, single buffered']
    #allocation14 [shape = 's32[1]{0}', space=sflag, size = 0x4, scoped, tag = 'scoped memory for _vae_forward_call.1']
    #allocation15 [shape = 'u8[512]{0}', space=vmem, size = 0x400, scoped, tag = 'input window, operand 11, single buffered']
    #allocation16 [shape = 'u8[32768]{0}', space=vmem, size = 0x8000, scoped, tag = 'input window, operand 12, single buffered']
    #allocation17 [shape = 's32[1]{0}', space=sflag, size = 0x4, scoped, tag = 'scoped memory for _vae_forward_call.1']
    #allocation18 [shape = 'u8[512]{0}', space=vmem, size = 0x400, scoped, tag = 'input window, operand 13, single buffered']
    %21 = vsyncpa [#allocation3], 0
    %22 = vsyncpa [#allocation5], 0
    %23 = vsyncpa [#allocation8], 0
    %24 = vsyncpa [#allocation11], 0
    %25 = vsyncpa [#allocation14], 0
    %26 = vsyncpa [#allocation17], 0
    // Predicated region
    $region2: #{_vae_forward_call.1} parent=1 // pred_check
      _
    $region3: #{_vae_forward_call.1} parent=1 // pred_check_branch
      %28 = sbr.rel (0) target = $region5
    $region4: #{_vae_forward_call.1} parent=1 // pred_region
      _
    $region5: #{_vae_forward_call.1} parent=1 // pred_fallthru
      _
    // Predicated region
    $region6: #{_vae_forward_call.1} parent=1 // pred_check
      _
    $region7: #{_vae_forward_call.1} parent=1 // pred_check_branch
      %30 = sbr.rel (0) target = $region9
    $region8: #{_vae_forward_call.1} parent=1 // pred_region
      _
    $region9: #{_vae_forward_call.1} parent=1 // pred_fallthru
      _
    // Predicated region
    $region10: #{_vae_forward_call.1} parent=1 // pred_check
      _
    $region11: #{_vae_forward_call.1} parent=1 // pred_check_branch
      %32 = sbr.rel (0) target = $region13
    $region12: #{_vae_forward_call.1} parent=1 // pred_region
      _
    $region13: #{_vae_forward_call.1} parent=1 // pred_fallthru
      _
    // Predicated region
    $region14: #{_vae_forward_call.1} parent=1 // pred_check
      _
    $region15: #{_vae_forward_call.1} parent=1 // pred_check_branch
      %34 = sbr.rel (0) target = $region17
    $region16: #{_vae_forward_call.1} parent=1 // pred_region
      %s36 = ssub.s32 16, 16
      %37 = vsyncadd [#allocation3], %s36
      %s39 = sshll.u32 [#allocation2], 4
      %s40 = int_to_ptr.vmem [resolvable:$true] %s39
      %42 = dma.hbm_to_vmem [thread:$0]  %s3, 16, %s40, [#allocation3]
    $region17: #{_vae_forward_call.1} parent=1 // pred_fallthru
      _
    // Predicated region
    $region18: #{_vae_forward_call.1} parent=1 // pred_check
      _
    $region19: #{_vae_forward_call.1} parent=1 // pred_check_branch
      %44 = sbr.rel (0) target = $region21
    $region20: #{_vae_forward_call.1} parent=1 // pred_region
      %s46 = ssub.s32 1024, 1024
      %47 = vsyncadd [#allocation5], %s46
      %s48 = sshll.u32 [#allocation4], 4
      %s49 = int_to_ptr.vmem [resolvable:$true] %s48
      %54 = dma.hbm_to_vmem [thread:$0]  %s4, 1024, %s49, [#allocation5], 64, 64, 4
    $region21: #{_vae_forward_call.1} parent=1 // pred_fallthru
      _
    // Predicated region
    $region22: #{_vae_forward_call.1} parent=1 // pred_check
      _
    $region23: #{_vae_forward_call.1} parent=1 // pred_check_branch
      %56 = sbr.rel (0) target = $region25
    $region24: #{_vae_forward_call.1} parent=1 // pred_region
      %s58 = ssub.s32 16, 16
      %59 = vsyncadd [#allocation5], %s58
      %s61 = sshll.u32 [#allocation6], 4
      %s62 = int_to_ptr.vmem [resolvable:$true] %s61
      %64 = dma.hbm_to_vmem [thread:$0]  %s5, 16, %s62, [#allocation5]
    $region25: #{_vae_forward_call.1} parent=1 // pred_fallthru
      _
    // Predicated region
    $region26: #{_vae_forward_call.1} parent=1 // pred_check
      _
    $region27: #{_vae_forward_call.1} parent=1 // pred_check_branch
      %66 = sbr.rel (0) target = $region29
    $region28: #{_vae_forward_call.1} parent=1 // pred_region
      %s68 = ssub.s32 2048, 2048
      %69 = vsyncadd [#allocation8], %s68
      %s70 = sshll.u32 [#allocation7], 4
      %s71 = int_to_ptr.vmem [resolvable:$true] %s70
      %76 = dma.hbm_to_vmem [thread:$0]  %s6, 2048, %s71, [#allocation8], 128, 128, 8
    $region29: #{_vae_forward_call.1} parent=1 // pred_fallthru
      _
    // Predicated region
    $region30: #{_vae_forward_call.1} parent=1 // pred_check
      _
    $region31: #{_vae_forward_call.1} parent=1 // pred_check_branch
      %78 = sbr.rel (0) target = $region33
    $region32: #{_vae_forward_call.1} parent=1 // pred_region
      %s80 = ssub.s32 32, 32
      %81 = vsyncadd [#allocation8], %s80
      %s83 = sshll.u32 [#allocation9], 4
      %s84 = int_to_ptr.vmem [resolvable:$true] %s83
      %86 = dma.hbm_to_vmem [thread:$0]  %s7, 32, %s84, [#allocation8]
    $region33: #{_vae_forward_call.1} parent=1 // pred_fallthru
      _
    // Predicated region
    $region34: #{_vae_forward_call.1} parent=1 // pred_check
      _
    $region35: #{_vae_forward_call.1} parent=1 // pred_check_branch
      %88 = sbr.rel (0) target = $region37
    $region36: #{_vae_forward_call.1} parent=1 // pred_region
      %s90 = ssub.s32 1024, 1024
      %91 = vsyncadd [#allocation11], %s90
      %s92 = sshll.u32 [#allocation10], 4
      %s93 = int_to_ptr.vmem [resolvable:$true] %s92
      %98 = dma.hbm_to_vmem [thread:$0]  %s8, 1024, %s93, [#allocation11], 64, 64, 4
    $region37: #{_vae_forward_call.1} parent=1 // pred_fallthru
      _
    // Predicated region
    $region38: #{_vae_forward_call.1} parent=1 // pred_check
      _
    $region39: #{_vae_forward_call.1} parent=1 // pred_check_branch
      %100 = sbr.rel (0) target = $region41
    $region40: #{_vae_forward_call.1} parent=1 // pred_region
      %s102 = ssub.s32 16, 16
      %103 = vsyncadd [#allocation11], %s102
      %s105 = sshll.u32 [#allocation12], 4
      %s106 = int_to_ptr.vmem [resolvable:$true] %s105
      %108 = dma.hbm_to_vmem [thread:$0]  %s9, 16, %s106, [#allocation11]
    $region41: #{_vae_forward_call.1} parent=1 // pred_fallthru
      _
    // Predicated region
    $region42: #{_vae_forward_call.1} parent=1 // pred_check
      _
    $region43: #{_vae_forward_call.1} parent=1 // pred_check_branch
      %110 = sbr.rel (0) target = $region45
    $region44: #{_vae_forward_call.1} parent=1 // pred_region
      %s112 = ssub.s32 1024, 1024
      %113 = vsyncadd [#allocation14], %s112
      %s114 = sshll.u32 [#allocation13], 4
      %s115 = int_to_ptr.vmem [resolvable:$true] %s114
      %120 = dma.hbm_to_vmem [thread:$0]  %s10, 1024, %s115, [#allocation14], 64, 64, 4
    $region45: #{_vae_forward_call.1} parent=1 // pred_fallthru
      _
    // Predicated region
    $region46: #{_vae_forward_call.1} parent=1 // pred_check
      _
    $region47: #{_vae_forward_call.1} parent=1 // pred_check_branch
      %122 = sbr.rel (0) target = $region49
    $region48: #{_vae_forward_call.1} parent=1 // pred_region
      %s124 = ssub.s32 16, 16
      %125 = vsyncadd [#allocation14], %s124
      %s127 = sshll.u32 [#allocation15], 4
      %s128 = int_to_ptr.vmem [resolvable:$true] %s127
      %130 = dma.hbm_to_vmem [thread:$0]  %s11, 16, %s128, [#allocation14]
    $region49: #{_vae_forward_call.1} parent=1 // pred_fallthru
      _
    // Predicated region
    $region50: #{_vae_forward_call.1} parent=1 // pred_check
      _
    $region51: #{_vae_forward_call.1} parent=1 // pred_check_branch
      %132 = sbr.rel (0) target = $region53
    $region52: #{_vae_forward_call.1} parent=1 // pred_region
      %s134 = ssub.s32 1024, 1024
      %135 = vsyncadd [#allocation17], %s134
      %s136 = sshll.u32 [#allocation16], 4
      %s137 = int_to_ptr.vmem [resolvable:$true] %s136
      %142 = dma.hbm_to_vmem [thread:$0]  %s12, 1024, %s137, [#allocation17], 64, 64, 4
    $region53: #{_vae_forward_call.1} parent=1 // pred_fallthru
      _
    // Predicated region
    $region54: #{_vae_forward_call.1} parent=1 // pred_check
      _
    $region55: #{_vae_forward_call.1} parent=1 // pred_check_branch
      %144 = sbr.rel (0) target = $region57
    $region56: #{_vae_forward_call.1} parent=1 // pred_region
      %s146 = ssub.s32 16, 16
      %147 = vsyncadd [#allocation17], %s146
      %s149 = sshll.u32 [#allocation18], 4
      %s150 = int_to_ptr.vmem [resolvable:$true] %s149
      %152 = dma.hbm_to_vmem [thread:$0]  %s13, 16, %s150, [#allocation17]
    $region57: #{_vae_forward_call.1} parent=1 // pred_fallthru
      _
    // Predicated region
    $region58: #{_vae_forward_call.1} parent=1 // pred_check
      _
    $region59: #{_vae_forward_call.1} parent=1 // pred_check_branch
      %154 = sbr.rel (0) target = $region61
    $region60: #{_vae_forward_call.1} parent=1 // pred_region
      %155 = dma.done [#allocation3], 16
    $region61: #{_vae_forward_call.1} parent=1 // pred_fallthru
      _
    // Predicated region
    $region62: #{_vae_forward_call.1} parent=1 // pred_check
      _
    $region63: #{_vae_forward_call.1} parent=1 // pred_check_branch
      %157 = sbr.rel (0) target = $region65
    $region64: #{_vae_forward_call.1} parent=1 // pred_region
      %158 = dma.done [#allocation5], 1024
    $region65: #{_vae_forward_call.1} parent=1 // pred_fallthru
      _
    // Predicated region
    $region66: #{_vae_forward_call.1} parent=1 // pred_check
      _
    $region67: #{_vae_forward_call.1} parent=1 // pred_check_branch
      %160 = sbr.rel (0) target = $region69
    $region68: #{_vae_forward_call.1} parent=1 // pred_region
      %161 = dma.done [#allocation5], 16
    $region69: #{_vae_forward_call.1} parent=1 // pred_fallthru
      _
    // Predicated region
    $region70: #{_vae_forward_call.1} parent=1 // pred_check
      _
    $region71: #{_vae_forward_call.1} parent=1 // pred_check_branch
      %163 = sbr.rel (0) target = $region73
    $region72: #{_vae_forward_call.1} parent=1 // pred_region
      %164 = dma.done [#allocation8], 2048
    $region73: #{_vae_forward_call.1} parent=1 // pred_fallthru
      _
    // Predicated region
    $region74: #{_vae_forward_call.1} parent=1 // pred_check
      _
    $region75: #{_vae_forward_call.1} parent=1 // pred_check_branch
      %166 = sbr.rel (0) target = $region77
    $region76: #{_vae_forward_call.1} parent=1 // pred_region
      %167 = dma.done [#allocation8], 32
    $region77: #{_vae_forward_call.1} parent=1 // pred_fallthru
      _
    // Predicated region
    $region78: #{_vae_forward_call.1} parent=1 // pred_check
      _
    $region79: #{_vae_forward_call.1} parent=1 // pred_check_branch
      %169 = sbr.rel (0) target = $region81
    $region80: #{_vae_forward_call.1} parent=1 // pred_region
      %170 = dma.done [#allocation11], 1024
    $region81: #{_vae_forward_call.1} parent=1 // pred_fallthru
      _
    // Predicated region
    $region82: #{_vae_forward_call.1} parent=1 // pred_check
      _
    $region83: #{_vae_forward_call.1} parent=1 // pred_check_branch
      %172 = sbr.rel (0) target = $region85
    $region84: #{_vae_forward_call.1} parent=1 // pred_region
      %173 = dma.done [#allocation11], 16
    $region85: #{_vae_forward_call.1} parent=1 // pred_fallthru
      _
    // Predicated region
    $region86: #{_vae_forward_call.1} parent=1 // pred_check
      _
    $region87: #{_vae_forward_call.1} parent=1 // pred_check_branch
      %175 = sbr.rel (0) target = $region89
    $region88: #{_vae_forward_call.1} parent=1 // pred_region
      %176 = dma.done [#allocation14], 1024
    $region89: #{_vae_forward_call.1} parent=1 // pred_fallthru
      _
    // Predicated region
    $region90: #{_vae_forward_call.1} parent=1 // pred_check
      _
    $region91: #{_vae_forward_call.1} parent=1 // pred_check_branch
      %178 = sbr.rel (0) target = $region93
    $region92: #{_vae_forward_call.1} parent=1 // pred_region
      %179 = dma.done [#allocation14], 16
    $region93: #{_vae_forward_call.1} parent=1 // pred_fallthru
      _
    // Predicated region
    $region94: #{_vae_forward_call.1} parent=1 // pred_check
      _
    $region95: #{_vae_forward_call.1} parent=1 // pred_check_branch
      %181 = sbr.rel (0) target = $region97
    $region96: #{_vae_forward_call.1} parent=1 // pred_region
      %182 = dma.done [#allocation17], 1024
    $region97: #{_vae_forward_call.1} parent=1 // pred_fallthru
      _
    // Predicated region
    $region98: #{_vae_forward_call.1} parent=1 // pred_check
      _
    $region99: #{_vae_forward_call.1} parent=1 // pred_check_branch
      %184 = sbr.rel (0) target = $region101
    $region100: #{_vae_forward_call.1} parent=1 // pred_region
      %185 = dma.done [#allocation17], 16
    $region101: #{_vae_forward_call.1} parent=1 // pred_fallthru
      _
    %v187 = vld [vmem:[%s0] sm:$0xf]
    %v188 = vld [vmem:[%s0 + $0x4] sm:$0xf]
    %v189 = vld [vmem:[%s2] sm:$0xf]
    %v190 = vld [vmem:[%s2 + $0x4] sm:$0xf]
    %v191 = vld [vmem:[%s2 + $0x8] sm:$0xf]
    %v192 = vld [vmem:[%s2 + $0xc] sm:$0xf]
    %v193 = vld [vmem:[%s2 + $0x10] sm:$0xf]
    %v194 = vld [vmem:[%s2 + $0x14] sm:$0xf]
    %v195 = vld [vmem:[%s2 + $0x18] sm:$0xf]
    %v196 = vld [vmem:[%s2 + $0x1c] sm:$0xf]
    %v197 = vld [vmem:[%s2 + $0x20] sm:$0xf]
    %v198 = vld [vmem:[%s2 + $0x24] sm:$0xf]
    %v199 = vld [vmem:[%s2 + $0x28] sm:$0xf]
    %v200 = vld [vmem:[%s2 + $0x2c] sm:$0xf]
    %v201 = vld [vmem:[%s2 + $0x30] sm:$0xf]
    %v202 = vld [vmem:[%s2 + $0x34] sm:$0xf]
    %v203 = vld [vmem:[%s2 + $0x38] sm:$0xf]
    %v204 = vld [vmem:[%s2 + $0x3c] sm:$0xf]
    %v205 = vld [vmem:[#allocation2] sm:$0x1]
    %v207 = vlaneseq
    %v208 = vshrl.u32 %v207, 7
    %v209 = vsub.s32 0, %v208
    %v210 = vrot.slane %v205, %v209
    %v214 = vunpack.c.l.b16 %v187
    %v215 = vunpack.c.l.b16 %v188
    %v216 = vpack.c.b16 %v215, %v214
    %v234 = vunpack.c.l.b16 %v189
    %v235 = vunpack.c.l.b16 %v190
    %v236 = vunpack.c.l.b16 %v191
    %v237 = vunpack.c.l.b16 %v192
    %v238 = vunpack.c.l.b16 %v193
    %v239 = vunpack.c.l.b16 %v194
    %v240 = vunpack.c.l.b16 %v195
    %v241 = vunpack.c.l.b16 %v196
    %v242 = vunpack.c.l.b16 %v197
    %v243 = vunpack.c.l.b16 %v198
    %v244 = vunpack.c.l.b16 %v199
    %v245 = vunpack.c.l.b16 %v200
    %v246 = vunpack.c.l.b16 %v201
    %v247 = vunpack.c.l.b16 %v202
    %v248 = vunpack.c.l.b16 %v203
    %v249 = vunpack.c.l.b16 %v204
    %v250 = vpack.c.b16 %v235, %v234
    %v251 = vpack.c.b16 %v237, %v236
    %v252 = vpack.c.b16 %v239, %v238
    %v253 = vpack.c.b16 %v241, %v240
    %v254 = vpack.c.b16 %v243, %v242
    %v255 = vpack.c.b16 %v245, %v244
    %v256 = vpack.c.b16 %v247, %v246
    %v257 = vpack.c.b16 %v249, %v248
    %266 = vmatprep.subr.bf16.mxu0 0
    %267 = vmatpush1.bf16.msra.mxu0 %v257
    %268 = vmatprep.subr.bf16.mxu0 0
    %269 = vmatpush1.bf16.msra.mxu0 %v256
    %270 = vmatprep.subr.bf16.mxu0 0
    %271 = vmatpush1.bf16.msra.mxu0 %v255
    %272 = vmatprep.subr.bf16.mxu0 0
    %273 = vmatpush1.bf16.msra.mxu0 %v254
    %274 = vmatprep.subr.bf16.mxu0 0
    %275 = vmatpush1.bf16.msra.mxu0 %v253
    %276 = vmatprep.subr.bf16.mxu0 0
    %277 = vmatpush1.bf16.msra.mxu0 %v252
    %278 = vmatprep.subr.bf16.mxu0 0
    %279 = vmatpush1.bf16.msra.mxu0 %v251
    %280 = vmatprep.subr.bf16.mxu0 0
    %281 = vmatpush1.bf16.msra.mxu0 %v250
    %282 = vmatprep.subr.bf16.mxu0 0
    %283 = vmatpush2.bf16.msra.mxu0 0
    %284 = vmatprep.subr.bf16.mxu0 0
    %285 = vmatpush2.bf16.msra.mxu0 0
    %286 = vmatprep.subr.bf16.mxu0 0
    %287 = vmatpush2.bf16.msra.mxu0 0
    %288 = vmatprep.subr.bf16.mxu0 0
    %289 = vmatpush2.bf16.msra.mxu0 0
    %290 = vmatprep.subr.bf16.mxu0 0
    %291 = vmatpush2.bf16.msra.mxu0 0
    %292 = vmatprep.subr.bf16.mxu0 0
    %293 = vmatpush2.bf16.msra.mxu0 0
    %294 = vmatprep.subr.bf16.mxu0 0
    %295 = vmatpush2.bf16.msra.mxu0 0
    %296 = vmatprep.subr.bf16.mxu0 0
    %297 = vmatpush2.bf16.msra.mxu0 0
    %298 = vmatprep.mubr.bf16.mxu0 0
    %299 = vmatmul.mubr.bf16.gmra.mxu0 %v216
    %v300 = vpop.f32.mrf.mxu0
    %v301 = vadd.f32 %v210, %v300
    %v302 = vpop.f32.mrf.mxu0
    %v303 = vpop.f32.mrf.mxu0
    %v304 = vadd.f32 %v210, %v303
    %v305 = vpop.f32.mrf.mxu0
    %306 = vdwg.mxu0
    %v307 = vmul.f32 %v301, 0.01
    %v308 = vmul.f32 %v304, 0.01
    %v309 = vmax.f32 %v301, %v307
    %v310 = vmax.f32 %v304, %v308
    %v311 = vpack.c.bf16 %v310, %v309
    %v312 = vld [vmem:[#allocation4] sm:$0xf]
    %v313 = vld [vmem:[#allocation4 + $0x4] sm:$0xf]
    %v314 = vld [vmem:[#allocation4 + $0x8] sm:$0xf]
    %v315 = vld [vmem:[#allocation4 + $0xc] sm:$0xf]
    %v316 = vld [vmem:[#allocation4 + $0x10] sm:$0xf]
    %v317 = vld [vmem:[#allocation4 + $0x14] sm:$0xf]
    %v318 = vld [vmem:[#allocation4 + $0x18] sm:$0xf]
    %v319 = vld [vmem:[#allocation4 + $0x1c] sm:$0xf]
    %v320 = vld [vmem:[#allocation4 + $0x20] sm:$0xf]
    %v321 = vld [vmem:[#allocation4 + $0x24] sm:$0xf]
    %v322 = vld [vmem:[#allocation4 + $0x28] sm:$0xf]
    %v323 = vld [vmem:[#allocation4 + $0x2c] sm:$0xf]
    %v324 = vld [vmem:[#allocation4 + $0x30] sm:$0xf]
    %v325 = vld [vmem:[#allocation4 + $0x34] sm:$0xf]
    %v326 = vld [vmem:[#allocation4 + $0x38] sm:$0xf]
    %v327 = vld [vmem:[#allocation4 + $0x3c] sm:$0xf]
    %v328 = vld [vmem:[#allocation6] sm:$0x1]
    %v330 = vlaneseq
    %v331 = vshrl.u32 %v330, 7
    %v332 = vsub.s32 0, %v331
    %v333 = vrot.slane %v328, %v332
    %v351 = vunpack.c.l.b16 %v312
    %v352 = vunpack.c.l.b16 %v313
    %v353 = vunpack.c.l.b16 %v314
    %v354 = vunpack.c.l.b16 %v315
    %v355 = vunpack.c.l.b16 %v316
    %v356 = vunpack.c.l.b16 %v317
    %v357 = vunpack.c.l.b16 %v318
    %v358 = vunpack.c.l.b16 %v319
    %v359 = vunpack.c.l.b16 %v320
    %v360 = vunpack.c.l.b16 %v321
    %v361 = vunpack.c.l.b16 %v322
    %v362 = vunpack.c.l.b16 %v323
    %v363 = vunpack.c.l.b16 %v324
    %v364 = vunpack.c.l.b16 %v325
    %v365 = vunpack.c.l.b16 %v326
    %v366 = vunpack.c.l.b16 %v327
    %v367 = vpack.c.b16 %v352, %v351
    %v368 = vpack.c.b16 %v354, %v353
    %v369 = vpack.c.b16 %v356, %v355
    %v370 = vpack.c.b16 %v358, %v357
    %v371 = vpack.c.b16 %v360, %v359
    %v372 = vpack.c.b16 %v362, %v361
    %v373 = vpack.c.b16 %v364, %v363
    %v374 = vpack.c.b16 %v366, %v365
    %383 = vmatprep.subr.bf16.mxu0 0
    %384 = vmatpush1.bf16.msra.mxu0 %v374
    %385 = vmatprep.subr.bf16.mxu0 0
    %386 = vmatpush1.bf16.msra.mxu0 %v373
    %387 = vmatprep.subr.bf16.mxu0 0
    %388 = vmatpush1.bf16.msra.mxu0 %v372
    %389 = vmatprep.subr.bf16.mxu0 0
    %390 = vmatpush1.bf16.msra.mxu0 %v371
    %391 = vmatprep.subr.bf16.mxu0 0
    %392 = vmatpush1.bf16.msra.mxu0 %v370
    %393 = vmatprep.subr.bf16.mxu0 0
    %394 = vmatpush1.bf16.msra.mxu0 %v369
    %395 = vmatprep.subr.bf16.mxu0 0
    %396 = vmatpush1.bf16.msra.mxu0 %v368
    %397 = vmatprep.subr.bf16.mxu0 0
    %398 = vmatpush1.bf16.msra.mxu0 %v367
    %399 = vmatprep.subr.bf16.mxu0 0
    %400 = vmatpush2.bf16.msra.mxu0 0
    %401 = vmatprep.subr.bf16.mxu0 0
    %402 = vmatpush2.bf16.msra.mxu0 0
    %403 = vmatprep.subr.bf16.mxu0 0
    %404 = vmatpush2.bf16.msra.mxu0 0
    %405 = vmatprep.subr.bf16.mxu0 0
    %406 = vmatpush2.bf16.msra.mxu0 0
    %407 = vmatprep.subr.bf16.mxu0 0
    %408 = vmatpush2.bf16.msra.mxu0 0
    %409 = vmatprep.subr.bf16.mxu0 0
    %410 = vmatpush2.bf16.msra.mxu0 0
    %411 = vmatprep.subr.bf16.mxu0 0
    %412 = vmatpush2.bf16.msra.mxu0 0
    %413 = vmatprep.subr.bf16.mxu0 0
    %414 = vmatpush2.bf16.msra.mxu0 0
    %415 = vmatprep.mubr.bf16.mxu0 0
    %416 = vmatmul.mubr.bf16.gmra.mxu0 %v311
    %v417 = vpop.f32.mrf.mxu0
    %v418 = vadd.f32 %v333, %v417
    %v419 = vpop.f32.mrf.mxu0
    %v420 = vpop.f32.mrf.mxu0
    %v421 = vadd.f32 %v333, %v420
    %v422 = vpop.f32.mrf.mxu0
    %423 = vdwg.mxu0
    %v424 = vmul.f32 %v418, 0.01
    %v425 = vmul.f32 %v421, 0.01
    %v426 = vmax.f32 %v418, %v424
    %v427 = vmax.f32 %v421, %v425
    %v428 = vpack.c.bf16 %v427, %v426
    %v429 = vld [vmem:[#allocation7] sm:$0xff]
    %v430 = vld [vmem:[#allocation7 + $0x8] sm:$0xff]
    %v431 = vld [vmem:[#allocation7 + $0x10] sm:$0xff]
    %v432 = vld [vmem:[#allocation7 + $0x18] sm:$0xff]
    %v433 = vld [vmem:[#allocation7 + $0x20] sm:$0xff]
    %v434 = vld [vmem:[#allocation7 + $0x28] sm:$0xff]
    %v435 = vld [vmem:[#allocation7 + $0x30] sm:$0xff]
    %v436 = vld [vmem:[#allocation7 + $0x38] sm:$0xff]
    %v437 = vld [vmem:[#allocation7 + $0x40] sm:$0xff]
    %v438 = vld [vmem:[#allocation7 + $0x48] sm:$0xff]
    %v439 = vld [vmem:[#allocation7 + $0x50] sm:$0xff]
    %v440 = vld [vmem:[#allocation7 + $0x58] sm:$0xff]
    %v441 = vld [vmem:[#allocation7 + $0x60] sm:$0xff]
    %v442 = vld [vmem:[#allocation7 + $0x68] sm:$0xff]
    %v443 = vld [vmem:[#allocation7 + $0x70] sm:$0xff]
    %v444 = vld [vmem:[#allocation7 + $0x78] sm:$0xff]
    %v445 = vld [vmem:[#allocation9] sm:$0x3]
    %v447 = vlaneseq
    %v448 = vshrl.u32 %v447, 7
    %v449 = vsub.s32 0, %v448
    %v450 = vrot.slane %v445, %v449
    %v451 = vlaneseq
    %v452 = vshrl.u32 %v451, 7
    %v453 = vsub.s32 1, %v452
    %v454 = vrot.slane %v445, %v453
    %v473 = vunpack.c.l.b16 %v429
    %v474 = vunpack.c.h.b16 %v429
    %v475 = vunpack.c.l.b16 %v430
    %v476 = vunpack.c.h.b16 %v430
    %v477 = vunpack.c.l.b16 %v431
    %v478 = vunpack.c.h.b16 %v431
    %v479 = vunpack.c.l.b16 %v432
    %v480 = vunpack.c.h.b16 %v432
    %v481 = vunpack.c.l.b16 %v433
    %v482 = vunpack.c.h.b16 %v433
    %v483 = vunpack.c.l.b16 %v434
    %v484 = vunpack.c.h.b16 %v434
    %v485 = vunpack.c.l.b16 %v435
    %v486 = vunpack.c.h.b16 %v435
    %v487 = vunpack.c.l.b16 %v436
    %v488 = vunpack.c.h.b16 %v436
    %v489 = vunpack.c.l.b16 %v437
    %v490 = vunpack.c.h.b16 %v437
    %v491 = vunpack.c.l.b16 %v438
    %v492 = vunpack.c.h.b16 %v438
    %v493 = vunpack.c.l.b16 %v439
    %v494 = vunpack.c.h.b16 %v439
    %v495 = vunpack.c.l.b16 %v440
    %v496 = vunpack.c.h.b16 %v440
    %v497 = vunpack.c.l.b16 %v441
    %v498 = vunpack.c.h.b16 %v441
    %v499 = vunpack.c.l.b16 %v442
    %v500 = vunpack.c.h.b16 %v442
    %v501 = vunpack.c.l.b16 %v443
    %v502 = vunpack.c.h.b16 %v443
    %v503 = vunpack.c.l.b16 %v444
    %v504 = vunpack.c.h.b16 %v444
    %v505 = vpack.c.b16 %v475, %v473
    %v506 = vpack.c.b16 %v476, %v474
    %v507 = vpack.c.b16 %v479, %v477
    %v508 = vpack.c.b16 %v480, %v478
    %v509 = vpack.c.b16 %v483, %v481
    %v510 = vpack.c.b16 %v484, %v482
    %v511 = vpack.c.b16 %v487, %v485
    %v512 = vpack.c.b16 %v488, %v486
    %v513 = vpack.c.b16 %v491, %v489
    %v514 = vpack.c.b16 %v492, %v490
    %v515 = vpack.c.b16 %v495, %v493
    %v516 = vpack.c.b16 %v496, %v494
    %v517 = vpack.c.b16 %v499, %v497
    %v518 = vpack.c.b16 %v500, %v498
    %v519 = vpack.c.b16 %v503, %v501
    %v520 = vpack.c.b16 %v504, %v502
    %537 = vmatprep.subr.bf16.mxu0 %v520
    %538 = vmatpush1.bf16.msra.mxu0 %v519
    %539 = vmatprep.subr.bf16.mxu0 %v518
    %540 = vmatpush1.bf16.msra.mxu0 %v517
    %541 = vmatprep.subr.bf16.mxu0 %v516
    %542 = vmatpush1.bf16.msra.mxu0 %v515
    %543 = vmatprep.subr.bf16.mxu0 %v514
    %544 = vmatpush1.bf16.msra.mxu0 %v513
    %545 = vmatprep.subr.bf16.mxu0 %v512
    %546 = vmatpush1.bf16.msra.mxu0 %v511
    %547 = vmatprep.subr.bf16.mxu0 %v510
    %548 = vmatpush1.bf16.msra.mxu0 %v509
    %549 = vmatprep.subr.bf16.mxu0 %v508
    %550 = vmatpush1.bf16.msra.mxu0 %v507
    %551 = vmatprep.subr.bf16.mxu0 %v506
    %552 = vmatpush1.bf16.msra.mxu0 %v505
    %553 = vmatprep.subr.bf16.mxu0 0
    %554 = vmatpush2.bf16.msra.mxu0 0
    %555 = vmatprep.subr.bf16.mxu0 0
    %556 = vmatpush2.bf16.msra.mxu0 0
    %557 = vmatprep.subr.bf16.mxu0 0
    %558 = vmatpush2.bf16.msra.mxu0 0
    %559 = vmatprep.subr.bf16.mxu0 0
    %560 = vmatpush2.bf16.msra.mxu0 0
    %561 = vmatprep.subr.bf16.mxu0 0
    %562 = vmatpush2.bf16.msra.mxu0 0
    %563 = vmatprep.subr.bf16.mxu0 0
    %564 = vmatpush2.bf16.msra.mxu0 0
    %565 = vmatprep.subr.bf16.mxu0 0
    %566 = vmatpush2.bf16.msra.mxu0 0
    %567 = vmatprep.subr.bf16.mxu0 0
    %568 = vmatpush2.bf16.msra.mxu0 0
    %569 = vmatprep.mubr.bf16.mxu0 0
    %570 = vmatmul.mubr.bf16.gmra.mxu0 %v428
    %v571 = vpop.f32.mrf.mxu0
    %v572 = vadd.f32 %v450, %v571
    %v573 = vpop.f32.mrf.mxu0
    %v574 = vadd.f32 %v454, %v573
    %v575 = vpop.f32.mrf.mxu0
    %v576 = vadd.f32 %v450, %v575
    %v577 = vpop.f32.mrf.mxu0
    %v578 = vadd.f32 %v454, %v577
    %579 = vdwg.mxu0
    %v580 = vld [vmem:[%s1] sm:$0xf]
    %v581 = vld [vmem:[%s1 + $0x4] sm:$0xf]
    %v582 = vunpack.c.l.bf16 %v580
    %v583 = vunpack.c.l.bf16 %v581
    %v584 = vmul.f32 %v574, 0.5
    %v585 = vmul.f32 %v578, 0.5
    %v586 = vmul.f32 %v584, 1.442695
    %v587 = vpow.pop %v586
    %v588 = vmul.f32 %v585, 1.442695
    %v589 = vpow.pop %v588
    %v590 = vmul.f32 %v582, %v587
    %v591 = vmul.f32 %v583, %v589
    %v592 = vadd.f32 %v572, %v590
    %v593 = vadd.f32 %v576, %v591
    %v594 = vpack.c.bf16 %v593, %v592
    %v595 = vld [vmem:[#allocation10] sm:$0xf]
    %v596 = vld [vmem:[#allocation10 + $0x4] sm:$0xf]
    %v597 = vld [vmem:[#allocation10 + $0x8] sm:$0xf]
    %v598 = vld [vmem:[#allocation10 + $0xc] sm:$0xf]
    %v599 = vld [vmem:[#allocation10 + $0x10] sm:$0xf]
    %v600 = vld [vmem:[#allocation10 + $0x14] sm:$0xf]
    %v601 = vld [vmem:[#allocation10 + $0x18] sm:$0xf]
    %v602 = vld [vmem:[#allocation10 + $0x1c] sm:$0xf]
    %v603 = vld [vmem:[#allocation10 + $0x20] sm:$0xf]
    %v604 = vld [vmem:[#allocation10 + $0x24] sm:$0xf]
    %v605 = vld [vmem:[#allocation10 + $0x28] sm:$0xf]
    %v606 = vld [vmem:[#allocation10 + $0x2c] sm:$0xf]
    %v607 = vld [vmem:[#allocation10 + $0x30] sm:$0xf]
    %v608 = vld [vmem:[#allocation10 + $0x34] sm:$0xf]
    %v609 = vld [vmem:[#allocation10 + $0x38] sm:$0xf]
    %v610 = vld [vmem:[#allocation10 + $0x3c] sm:$0xf]
    %v611 = vld [vmem:[#allocation12] sm:$0x1]
    %v613 = vlaneseq
    %v614 = vshrl.u32 %v613, 7
    %v615 = vsub.s32 0, %v614
    %v616 = vrot.slane %v611, %v615
    %v634 = vunpack.c.l.b16 %v595
    %v635 = vunpack.c.l.b16 %v596
    %v636 = vunpack.c.l.b16 %v597
    %v637 = vunpack.c.l.b16 %v598
    %v638 = vunpack.c.l.b16 %v599
    %v639 = vunpack.c.l.b16 %v600
    %v640 = vunpack.c.l.b16 %v601
    %v641 = vunpack.c.l.b16 %v602
    %v642 = vunpack.c.l.b16 %v603
    %v643 = vunpack.c.l.b16 %v604
    %v644 = vunpack.c.l.b16 %v605
    %v645 = vunpack.c.l.b16 %v606
    %v646 = vunpack.c.l.b16 %v607
    %v647 = vunpack.c.l.b16 %v608
    %v648 = vunpack.c.l.b16 %v609
    %v649 = vunpack.c.l.b16 %v610
    %v650 = vpack.c.b16 %v635, %v634
    %v651 = vpack.c.b16 %v637, %v636
    %v652 = vpack.c.b16 %v639, %v638
    %v653 = vpack.c.b16 %v641, %v640
    %v654 = vpack.c.b16 %v643, %v642
    %v655 = vpack.c.b16 %v645, %v644
    %v656 = vpack.c.b16 %v647, %v646
    %v657 = vpack.c.b16 %v649, %v648
    %666 = vmatprep.subr.bf16.mxu0 0
    %667 = vmatpush1.bf16.msra.mxu0 %v657
    %668 = vmatprep.subr.bf16.mxu0 0
    %669 = vmatpush1.bf16.msra.mxu0 %v656
    %670 = vmatprep.subr.bf16.mxu0 0
    %671 = vmatpush1.bf16.msra.mxu0 %v655
    %672 = vmatprep.subr.bf16.mxu0 0
    %673 = vmatpush1.bf16.msra.mxu0 %v654
    %674 = vmatprep.subr.bf16.mxu0 0
    %675 = vmatpush1.bf16.msra.mxu0 %v653
    %676 = vmatprep.subr.bf16.mxu0 0
    %677 = vmatpush1.bf16.msra.mxu0 %v652
    %678 = vmatprep.subr.bf16.mxu0 0
    %679 = vmatpush1.bf16.msra.mxu0 %v651
    %680 = vmatprep.subr.bf16.mxu0 0
    %681 = vmatpush1.bf16.msra.mxu0 %v650
    %682 = vmatprep.subr.bf16.mxu0 0
    %683 = vmatpush2.bf16.msra.mxu0 0
    %684 = vmatprep.subr.bf16.mxu0 0
    %685 = vmatpush2.bf16.msra.mxu0 0
    %686 = vmatprep.subr.bf16.mxu0 0
    %687 = vmatpush2.bf16.msra.mxu0 0
    %688 = vmatprep.subr.bf16.mxu0 0
    %689 = vmatpush2.bf16.msra.mxu0 0
    %690 = vmatprep.subr.bf16.mxu0 0
    %691 = vmatpush2.bf16.msra.mxu0 0
    %692 = vmatprep.subr.bf16.mxu0 0
    %693 = vmatpush2.bf16.msra.mxu0 0
    %694 = vmatprep.subr.bf16.mxu0 0
    %695 = vmatpush2.bf16.msra.mxu0 0
    %696 = vmatprep.subr.bf16.mxu0 0
    %697 = vmatpush2.bf16.msra.mxu0 0
    %698 = vmatprep.mubr.bf16.mxu0 0
    %699 = vmatmul.mubr.bf16.gmra.mxu0 %v594
    %v700 = vpop.f32.mrf.mxu0
    %v701 = vadd.f32 %v616, %v700
    %v702 = vpop.f32.mrf.mxu0
    %v703 = vpop.f32.mrf.mxu0
    %v704 = vadd.f32 %v616, %v703
    %v705 = vpop.f32.mrf.mxu0
    %706 = vdwg.mxu0
    %v707 = vmul.f32 %v701, 0.01
    %v708 = vmul.f32 %v704, 0.01
    %v709 = vmax.f32 %v701, %v707
    %v710 = vmax.f32 %v704, %v708
    %v711 = vpack.c.bf16 %v710, %v709
    %v712 = vld [vmem:[#allocation13] sm:$0xf]
    %v713 = vld [vmem:[#allocation13 + $0x4] sm:$0xf]
    %v714 = vld [vmem:[#allocation13 + $0x8] sm:$0xf]
    %v715 = vld [vmem:[#allocation13 + $0xc] sm:$0xf]
    %v716 = vld [vmem:[#allocation13 + $0x10] sm:$0xf]
    %v717 = vld [vmem:[#allocation13 + $0x14] sm:$0xf]
    %v718 = vld [vmem:[#allocation13 + $0x18] sm:$0xf]
    %v719 = vld [vmem:[#allocation13 + $0x1c] sm:$0xf]
    %v720 = vld [vmem:[#allocation13 + $0x20] sm:$0xf]
    %v721 = vld [vmem:[#allocation13 + $0x24] sm:$0xf]
    %v722 = vld [vmem:[#allocation13 + $0x28] sm:$0xf]
    %v723 = vld [vmem:[#allocation13 + $0x2c] sm:$0xf]
    %v724 = vld [vmem:[#allocation13 + $0x30] sm:$0xf]
    %v725 = vld [vmem:[#allocation13 + $0x34] sm:$0xf]
    %v726 = vld [vmem:[#allocation13 + $0x38] sm:$0xf]
    %v727 = vld [vmem:[#allocation13 + $0x3c] sm:$0xf]
    %v728 = vld [vmem:[#allocation15] sm:$0x1]
    %v730 = vlaneseq
    %v731 = vshrl.u32 %v730, 7
    %v732 = vsub.s32 0, %v731
    %v733 = vrot.slane %v728, %v732
    %v751 = vunpack.c.l.b16 %v712
    %v752 = vunpack.c.l.b16 %v713
    %v753 = vunpack.c.l.b16 %v714
    %v754 = vunpack.c.l.b16 %v715
    %v755 = vunpack.c.l.b16 %v716
    %v756 = vunpack.c.l.b16 %v717
    %v757 = vunpack.c.l.b16 %v718
    %v758 = vunpack.c.l.b16 %v719
    %v759 = vunpack.c.l.b16 %v720
    %v760 = vunpack.c.l.b16 %v721
    %v761 = vunpack.c.l.b16 %v722
    %v762 = vunpack.c.l.b16 %v723
    %v763 = vunpack.c.l.b16 %v724
    %v764 = vunpack.c.l.b16 %v725
    %v765 = vunpack.c.l.b16 %v726
    %v766 = vunpack.c.l.b16 %v727
    %v767 = vpack.c.b16 %v752, %v751
    %v768 = vpack.c.b16 %v754, %v753
    %v769 = vpack.c.b16 %v756, %v755
    %v770 = vpack.c.b16 %v758, %v757
    %v771 = vpack.c.b16 %v760, %v759
    %v772 = vpack.c.b16 %v762, %v761
    %v773 = vpack.c.b16 %v764, %v763
    %v774 = vpack.c.b16 %v766, %v765
    %783 = vmatprep.subr.bf16.mxu0 0
    %784 = vmatpush1.bf16.msra.mxu0 %v774
    %785 = vmatprep.subr.bf16.mxu0 0
    %786 = vmatpush1.bf16.msra.mxu0 %v773
    %787 = vmatprep.subr.bf16.mxu0 0
    %788 = vmatpush1.bf16.msra.mxu0 %v772
    %789 = vmatprep.subr.bf16.mxu0 0
    %790 = vmatpush1.bf16.msra.mxu0 %v771
    %791 = vmatprep.subr.bf16.mxu0 0
    %792 = vmatpush1.bf16.msra.mxu0 %v770
    %793 = vmatprep.subr.bf16.mxu0 0
    %794 = vmatpush1.bf16.msra.mxu0 %v769
    %795 = vmatprep.subr.bf16.mxu0 0
    %796 = vmatpush1.bf16.msra.mxu0 %v768
    %797 = vmatprep.subr.bf16.mxu0 0
    %798 = vmatpush1.bf16.msra.mxu0 %v767
    %799 = vmatprep.subr.bf16.mxu0 0
    %800 = vmatpush2.bf16.msra.mxu0 0
    %801 = vmatprep.subr.bf16.mxu0 0
    %802 = vmatpush2.bf16.msra.mxu0 0
    %803 = vmatprep.subr.bf16.mxu0 0
    %804 = vmatpush2.bf16.msra.mxu0 0
    %805 = vmatprep.subr.bf16.mxu0 0
    %806 = vmatpush2.bf16.msra.mxu0 0
    %807 = vmatprep.subr.bf16.mxu0 0
    %808 = vmatpush2.bf16.msra.mxu0 0
    %809 = vmatprep.subr.bf16.mxu0 0
    %810 = vmatpush2.bf16.msra.mxu0 0
    %811 = vmatprep.subr.bf16.mxu0 0
    %812 = vmatpush2.bf16.msra.mxu0 0
    %813 = vmatprep.subr.bf16.mxu0 0
    %814 = vmatpush2.bf16.msra.mxu0 0
    %815 = vmatprep.mubr.bf16.mxu0 0
    %816 = vmatmul.mubr.bf16.gmra.mxu0 %v711
    %v817 = vpop.f32.mrf.mxu0
    %v818 = vadd.f32 %v733, %v817
    %v819 = vpop.f32.mrf.mxu0
    %v820 = vpop.f32.mrf.mxu0
    %v821 = vadd.f32 %v733, %v820
    %v822 = vpop.f32.mrf.mxu0
    %823 = vdwg.mxu0
    %v824 = vmul.f32 %v818, 0.01
    %v825 = vmul.f32 %v821, 0.01
    %v826 = vmax.f32 %v818, %v824
    %v827 = vmax.f32 %v821, %v825
    %v828 = vpack.c.bf16 %v827, %v826
    %v829 = vld [vmem:[#allocation16] sm:$0xf]
    %v830 = vld [vmem:[#allocation16 + $0x4] sm:$0xf]
    %v831 = vld [vmem:[#allocation16 + $0x8] sm:$0xf]
    %v832 = vld [vmem:[#allocation16 + $0xc] sm:$0xf]
    %v833 = vld [vmem:[#allocation16 + $0x10] sm:$0xf]
    %v834 = vld [vmem:[#allocation16 + $0x14] sm:$0xf]
    %v835 = vld [vmem:[#allocation16 + $0x18] sm:$0xf]
    %v836 = vld [vmem:[#allocation16 + $0x1c] sm:$0xf]
    %v837 = vld [vmem:[#allocation16 + $0x20] sm:$0xf]
    %v838 = vld [vmem:[#allocation16 + $0x24] sm:$0xf]
    %v839 = vld [vmem:[#allocation16 + $0x28] sm:$0xf]
    %v840 = vld [vmem:[#allocation16 + $0x2c] sm:$0xf]
    %v841 = vld [vmem:[#allocation16 + $0x30] sm:$0xf]
    %v842 = vld [vmem:[#allocation16 + $0x34] sm:$0xf]
    %v843 = vld [vmem:[#allocation16 + $0x38] sm:$0xf]
    %v844 = vld [vmem:[#allocation16 + $0x3c] sm:$0xf]
    %v845 = vld [vmem:[#allocation18] sm:$0x1]
    %v847 = vlaneseq
    %v848 = vshrl.u32 %v847, 7
    %v849 = vsub.s32 0, %v848
    %v850 = vrot.slane %v845, %v849
    %v868 = vunpack.c.l.b16 %v829
    %v869 = vunpack.c.l.b16 %v830
    %v870 = vunpack.c.l.b16 %v831
    %v871 = vunpack.c.l.b16 %v832
    %v872 = vunpack.c.l.b16 %v833
    %v873 = vunpack.c.l.b16 %v834
    %v874 = vunpack.c.l.b16 %v835
    %v875 = vunpack.c.l.b16 %v836
    %v876 = vunpack.c.l.b16 %v837
    %v877 = vunpack.c.l.b16 %v838
    %v878 = vunpack.c.l.b16 %v839
    %v879 = vunpack.c.l.b16 %v840
    %v880 = vunpack.c.l.b16 %v841
    %v881 = vunpack.c.l.b16 %v842
    %v882 = vunpack.c.l.b16 %v843
    %v883 = vunpack.c.l.b16 %v844
    %v884 = vpack.c.b16 %v869, %v868
    %v885 = vpack.c.b16 %v871, %v870
    %v886 = vpack.c.b16 %v873, %v872
    %v887 = vpack.c.b16 %v875, %v874
    %v888 = vpack.c.b16 %v877, %v876
    %v889 = vpack.c.b16 %v879, %v878
    %v890 = vpack.c.b16 %v881, %v880
    %v891 = vpack.c.b16 %v883, %v882
    %900 = vmatprep.subr.bf16.mxu0 0
    %901 = vmatpush1.bf16.msra.mxu0 %v891
    %902 = vmatprep.subr.bf16.mxu0 0
    %903 = vmatpush1.bf16.msra.mxu0 %v890
    %904 = vmatprep.subr.bf16.mxu0 0
    %905 = vmatpush1.bf16.msra.mxu0 %v889
    %906 = vmatprep.subr.bf16.mxu0 0
    %907 = vmatpush1.bf16.msra.mxu0 %v888
    %908 = vmatprep.subr.bf16.mxu0 0
    %909 = vmatpush1.bf16.msra.mxu0 %v887
    %910 = vmatprep.subr.bf16.mxu0 0
    %911 = vmatpush1.bf16.msra.mxu0 %v886
    %912 = vmatprep.subr.bf16.mxu0 0
    %913 = vmatpush1.bf16.msra.mxu0 %v885
    %914 = vmatprep.subr.bf16.mxu0 0
    %915 = vmatpush1.bf16.msra.mxu0 %v884
    %916 = vmatprep.subr.bf16.mxu0 0
    %917 = vmatpush2.bf16.msra.mxu0 0
    %918 = vmatprep.subr.bf16.mxu0 0
    %919 = vmatpush2.bf16.msra.mxu0 0
    %920 = vmatprep.subr.bf16.mxu0 0
    %921 = vmatpush2.bf16.msra.mxu0 0
    %922 = vmatprep.subr.bf16.mxu0 0
    %923 = vmatpush2.bf16.msra.mxu0 0
    %924 = vmatprep.subr.bf16.mxu0 0
    %925 = vmatpush2.bf16.msra.mxu0 0
    %926 = vmatprep.subr.bf16.mxu0 0
    %927 = vmatpush2.bf16.msra.mxu0 0
    %928 = vmatprep.subr.bf16.mxu0 0
    %929 = vmatpush2.bf16.msra.mxu0 0
    %930 = vmatprep.subr.bf16.mxu0 0
    %931 = vmatpush2.bf16.msra.mxu0 0
    %932 = vmatprep.mubr.bf16.mxu0 0
    %933 = vmatmul.mubr.bf16.gmra.mxu0 %v828
    %v934 = vpop.f32.mrf.mxu0
    %v935 = vadd.f32 %v850, %v934
    %v936 = vpop.f32.mrf.mxu0
    %v937 = vpop.f32.mrf.mxu0
    %v938 = vadd.f32 %v850, %v937
    %v939 = vpop.f32.mrf.mxu0
    %940 = vdwg.mxu0
    %v941 = vmax.f32 %v935, 0.0
    %v942 = vmax.f32 %v938, 0.0
    %v943 = vpack.c.bf16 %v942, %v941
    %v945 = vunpack.c.l.b16 %v943
    %v946 = vunpack.c.h.b16 %v943
    %v947 = vpack.c.b16 %v945, %v945
    %v948 = vpack.c.b16 %v946, %v946
    %951 = vst [vmem:[%s14] sm:$0xf] %v947
    %952 = vst [vmem:[%s14 + $0x4] sm:$0xf] %v948
    %953 = vst [vmem:[%s15] sm:$0xff] %v572
    %954 = vst [vmem:[%s15 + $0x8] sm:$0xff] %v574
    %955 = vst [vmem:[%s15 + $0x10] sm:$0xff] %v576
    %956 = vst [vmem:[%s15 + $0x18] sm:$0xff] %v578
    // Predicated region
    $region102: #{_vae_forward_call.1} parent=1 // pred_check
      _
    $region103: #{_vae_forward_call.1} parent=1 // pred_check_branch
      %958 = sbr.rel (0) target = $region105
    $region104: #{_vae_forward_call.1} parent=1 // pred_region
      _
    $region105: #{_vae_forward_call.1} parent=1 // pred_fallthru
      _
    // Predicated region
    $region106: #{_vae_forward_call.1} parent=1 // pred_check
      _
    $region107: #{_vae_forward_call.1} parent=1 // pred_check_branch
      %960 = sbr.rel (0) target = $region109
    $region108: #{_vae_forward_call.1} parent=1 // pred_region
      _
    $region109: #{_vae_forward_call.1} parent=1 // pred_fallthru
      _
    // Predicated region
    $region110: #{_vae_forward_call.1} parent=1 // pred_check
      _
    $region111: #{_vae_forward_call.1} parent=1 // pred_check_branch
      %962 = sbr.rel (0) target = $region113
    $region112: #{_vae_forward_call.1} parent=1 // pred_region
      _
    $region113: #{_vae_forward_call.1} parent=1 // pred_fallthru
      _
    // Predicated region
    $region114: #{_vae_forward_call.1} parent=1 // pred_check
      _
    $region115: #{_vae_forward_call.1} parent=1 // pred_check_branch
      %964 = sbr.rel (0) target = $region117
    $region116: #{_vae_forward_call.1} parent=1 // pred_region
      _
    $region117: #{_vae_forward_call.1} parent=1 // pred_fallthru
      _
    %965 = vsyncpa [#allocation3], 1
    %966 = vsyncpa [#allocation5], 1
    %967 = vsyncpa [#allocation8], 1
    %968 = vsyncpa [#allocation11], 1
    %969 = vsyncpa [#allocation14], 1
    %970 = vsyncpa [#allocation17], 1

// kernel: _vae_forward_call.1
$region0: #{_vae_forward_call.1}
  #allocation0 [shape = 'u32[]', space=smem, size = 0x4, offset = 0x4, fixed_abs, tag = 'smem constant byte address 0x4 - core index']
  #allocation1 [shape = 'u32[144,128]{1,0:T(1,128)}', space=vmem, size = 0x12000, scoped, tag = 'internal scratch']
  %s0 = inlined_call_operand.vmem [shape: bf16[16,128], index: 0, kind: input, shape index: {}]
  %s1 = inlined_call_operand.vmem [shape: bf16[16,128], index: 1, kind: input, shape index: {}]
  %s2 = inlined_call_operand.vmem [shape: bf16[128,128], index: 2, kind: input, shape index: {}]
  %s3 = inlined_call_operand.hbm [shape: f32[1,128], index: 3, kind: input, shape index: {}]
  %s4 = inlined_call_operand.hbm [shape: bf16[128,128], index: 4, kind: input, shape index: {}]
  %s5 = inlined_call_operand.hbm [shape: f32[1,128], index: 5, kind: input, shape index: {}]
  %s6 = inlined_call_operand.hbm [shape: bf16[128,256], index: 6, kind: input, shape index: {}]
  %s7 = inlined_call_operand.hbm [shape: f32[1,256], index: 7, kind: input, shape index: {}]
  %s8 = inlined_call_operand.hbm [shape: bf16[128,128], index: 8, kind: input, shape index: {}]
  %s9 = inlined_call_operand.hbm [shape: f32[1,128], index: 9, kind: input, shape index: {}]
  %s10 = inlined_call_operand.hbm [shape: bf16[128,128], index: 10, kind: input, shape index: {}]
  %s11 = inlined_call_operand.hbm [shape: f32[1,128], index: 11, kind: input, shape index: {}]
  %s12 = inlined_call_operand.hbm [shape: bf16[128,128], index: 12, kind: input, shape index: {}]
  %s13 = inlined_call_operand.hbm [shape: f32[1,128], index: 13, kind: input, shape index: {}]
  %s14 = inlined_call_operand.vmem [shape: bf16[16,128], index: 14, kind: output, shape index: {0}]
  %s15 = inlined_call_operand.vmem [shape: f32[16,256], index: 15, kind: output, shape index: {1}]
  %16 = xla_tuple %s14, %s15
  %s17 = sld [smem:[#allocation0]]
  $region118: #{_vae_forward_call.1} parent=0
    _
  %s19 = ssub.s32 1, %s17
  %s20 = scalar_select 0, %s19, %s17
  $region1: #{_vae_forward_call.1} parent=0
    #allocation2 [shape = 'u8[512]{0}', space=vmem, size = 0x400, scoped, tag = 'input window, operand 3, single buffered']
    #allocation3 [shape = 's32[1]{0}', space=sflag, size = 0x4, scoped, tag = 'scoped memory for _vae_forward_call.1']
    #allocation4 [shape = 'u8[32768]{0}', space=vmem, size = 0x8000, scoped, tag = 'input window, operand 4, single buffered']
    #allocation5 [shape = 's32[1]{0}', space=sflag, size = 0x4, scoped, tag = 'scoped memory for _vae_forward_call.1']
    #allocation6 [shape = 'u8[512]{0}', space=vmem, size = 0x400, scoped, tag = 'input window, operand 5, single buffered']
    #allocation7 [shape = 'u8[65536]{0}', space=vmem, size = 0x10000, scoped, tag = 'input window, operand 6, single buffered']
    #allocation8 [shape = 's32[1]{0}', space=sflag, size = 0x4, scoped, tag = 'scoped memory for _vae_forward_call.1']
    #allocation9 [shape = 'u8[1024]{0}', space=vmem, size = 0x400, scoped, tag = 'input window, operand 7, single buffered']
    #allocation10 [shape = 'u8[32768]{0}', space=vmem, size = 0x8000, scoped, tag = 'input window, operand 8, single buffered']
    #allocation11 [shape = 's32[1]{0}', space=sflag, size = 0x4, scoped, tag = 'scoped memory for _vae_forward_call.1']
    #allocation12 [shape = 'u8[512]{0}', space=vmem, size = 0x400, scoped, tag = 'input window, operand 9, single buffered']
    #allocation13 [shape = 'u8[32768]{0}', space=vmem, size = 0x8000, scoped, tag = 'input window, operand 10, single buffered']
    #allocation14 [shape = 's32[1]{0}', space=sflag, size = 0x4, scoped, tag = 'scoped memory for _vae_forward_call.1']
    #allocation15 [shape = 'u8[512]{0}', space=vmem, size = 0x400, scoped, tag = 'input window, operand 11, single buffered']
    #allocation16 [shape = 'u8[32768]{0}', space=vmem, size = 0x8000, scoped, tag = 'input window, operand 12, single buffered']
    #allocation17 [shape = 's32[1]{0}', space=sflag, size = 0x4, scoped, tag = 'scoped memory for _vae_forward_call.1']
    #allocation18 [shape = 'u8[512]{0}', space=vmem, size = 0x400, scoped, tag = 'input window, operand 13, single buffered']
    %21 = vsyncpa [#allocation3], 0
    %22 = vsyncpa [#allocation5], 0
    %23 = vsyncpa [#allocation8], 0
    %24 = vsyncpa [#allocation11], 0
    %25 = vsyncpa [#allocation14], 0
    %26 = vsyncpa [#allocation17], 0
    // Predicated region
    $region2: #{_vae_forward_call.1} parent=1 // pred_check
      _
    $region3: #{_vae_forward_call.1} parent=1 // pred_check_branch
      %28 = sbr.rel (0) target = $region5
    $region4: #{_vae_forward_call.1} parent=1 // pred_region
      _
    $region5: #{_vae_forward_call.1} parent=1 // pred_fallthru
      _
    // Predicated region
    $region6: #{_vae_forward_call.1} parent=1 // pred_check
      _
    $region7: #{_vae_forward_call.1} parent=1 // pred_check_branch
      %30 = sbr.rel (0) target = $region9
    $region8: #{_vae_forward_call.1} parent=1 // pred_region
      _
    $region9: #{_vae_forward_call.1} parent=1 // pred_fallthru
      _
    // Predicated region
    $region10: #{_vae_forward_call.1} parent=1 // pred_check
      _
    $region11: #{_vae_forward_call.1} parent=1 // pred_check_branch
      %32 = sbr.rel (0) target = $region13
    $region12: #{_vae_forward_call.1} parent=1 // pred_region
      _
    $region13: #{_vae_forward_call.1} parent=1 // pred_fallthru
      _
    // Predicated region
    $region14: #{_vae_forward_call.1} parent=1 // pred_check
      _
    $region15: #{_vae_forward_call.1} parent=1 // pred_check_branch
      %34 = sbr.rel (0) target = $region17
    $region16: #{_vae_forward_call.1} parent=1 // pred_region
      %s36 = ssub.s32 16, 16
      %37 = vsyncadd [#allocation3], %s36
      %s39 = sshll.u32 [#allocation2], 4
      %s40 = int_to_ptr.vmem [resolvable:$true] %s39
      %42 = dma.hbm_to_vmem [thread:$0]  %s3, 16, %s40, [#allocation3]
    $region17: #{_vae_forward_call.1} parent=1 // pred_fallthru
      _
    // Predicated region
    $region18: #{_vae_forward_call.1} parent=1 // pred_check
      _
    $region19: #{_vae_forward_call.1} parent=1 // pred_check_branch
      %44 = sbr.rel (0) target = $region21
    $region20: #{_vae_forward_call.1} parent=1 // pred_region
      %s46 = ssub.s32 1024, 1024
      %47 = vsyncadd [#allocation5], %s46
      %s48 = sshll.u32 [#allocation4], 4
      %s49 = int_to_ptr.vmem [resolvable:$true] %s48
      %54 = dma.hbm_to_vmem [thread:$0]  %s4, 1024, %s49, [#allocation5], 64, 64, 4
    $region21: #{_vae_forward_call.1} parent=1 // pred_fallthru
      _
    // Predicated region
    $region22: #{_vae_forward_call.1} parent=1 // pred_check
      _
    $region23: #{_vae_forward_call.1} parent=1 // pred_check_branch
      %56 = sbr.rel (0) target = $region25
    $region24: #{_vae_forward_call.1} parent=1 // pred_region
      %s58 = ssub.s32 16, 16
      %59 = vsyncadd [#allocation5], %s58
      %s61 = sshll.u32 [#allocation6], 4
      %s62 = int_to_ptr.vmem [resolvable:$true] %s61
      %64 = dma.hbm_to_vmem [thread:$0]  %s5, 16, %s62, [#allocation5]
    $region25: #{_vae_forward_call.1} parent=1 // pred_fallthru
      _
    // Predicated region
    $region26: #{_vae_forward_call.1} parent=1 // pred_check
      _
    $region27: #{_vae_forward_call.1} parent=1 // pred_check_branch
      %66 = sbr.rel (0) target = $region29
    $region28: #{_vae_forward_call.1} parent=1 // pred_region
      %s68 = ssub.s32 2048, 2048
      %69 = vsyncadd [#allocation8], %s68
      %s70 = sshll.u32 [#allocation7], 4
      %s71 = int_to_ptr.vmem [resolvable:$true] %s70
      %76 = dma.hbm_to_vmem [thread:$0]  %s6, 2048, %s71, [#allocation8], 128, 128, 8
    $region29: #{_vae_forward_call.1} parent=1 // pred_fallthru
      _
    // Predicated region
    $region30: #{_vae_forward_call.1} parent=1 // pred_check
      _
    $region31: #{_vae_forward_call.1} parent=1 // pred_check_branch
      %78 = sbr.rel (0) target = $region33
    $region32: #{_vae_forward_call.1} parent=1 // pred_region
      %s80 = ssub.s32 32, 32
      %81 = vsyncadd [#allocation8], %s80
      %s83 = sshll.u32 [#allocation9], 4
      %s84 = int_to_ptr.vmem [resolvable:$true] %s83
      %86 = dma.hbm_to_vmem [thread:$0]  %s7, 32, %s84, [#allocation8]
    $region33: #{_vae_forward_call.1} parent=1 // pred_fallthru
      _
    // Predicated region
    $region34: #{_vae_forward_call.1} parent=1 // pred_check
      _
    $region35: #{_vae_forward_call.1} parent=1 // pred_check_branch
      %88 = sbr.rel (0) target = $region37
    $region36: #{_vae_forward_call.1} parent=1 // pred_region
      %s90 = ssub.s32 1024, 1024
      %91 = vsyncadd [#allocation11], %s90
      %s92 = sshll.u32 [#allocation10], 4
      %s93 = int_to_ptr.vmem [resolvable:$true] %s92
      %98 = dma.hbm_to_vmem [thread:$0]  %s8, 1024, %s93, [#allocation11], 64, 64, 4
    $region37: #{_vae_forward_call.1} parent=1 // pred_fallthru
      _
    // Predicated region
    $region38: #{_vae_forward_call.1} parent=1 // pred_check
      _
    $region39: #{_vae_forward_call.1} parent=1 // pred_check_branch
      %100 = sbr.rel (0) target = $region41
    $region40: #{_vae_forward_call.1} parent=1 // pred_region
      %s102 = ssub.s32 16, 16
      %103 = vsyncadd [#allocation11], %s102
      %s105 = sshll.u32 [#allocation12], 4
      %s106 = int_to_ptr.vmem [resolvable:$true] %s105
      %108 = dma.hbm_to_vmem [thread:$0]  %s9, 16, %s106, [#allocation11]
    $region41: #{_vae_forward_call.1} parent=1 // pred_fallthru
      _
    // Predicated region
    $region42: #{_vae_forward_call.1} parent=1 // pred_check
      _
    $region43: #{_vae_forward_call.1} parent=1 // pred_check_branch
      %110 = sbr.rel (0) target = $region45
    $region44: #{_vae_forward_call.1} parent=1 // pred_region
      %s112 = ssub.s32 1024, 1024
      %113 = vsyncadd [#allocation14], %s112
      %s114 = sshll.u32 [#allocation13], 4
      %s115 = int_to_ptr.vmem [resolvable:$true] %s114
      %120 = dma.hbm_to_vmem [thread:$0]  %s10, 1024, %s115, [#allocation14], 64, 64, 4
    $region45: #{_vae_forward_call.1} parent=1 // pred_fallthru
      _
    // Predicated region
    $region46: #{_vae_forward_call.1} parent=1 // pred_check
      _
    $region47: #{_vae_forward_call.1} parent=1 // pred_check_branch
      %122 = sbr.rel (0) target = $region49
    $region48: #{_vae_forward_call.1} parent=1 // pred_region
      %s124 = ssub.s32 16, 16
      %125 = vsyncadd [#allocation14], %s124
      %s127 = sshll.u32 [#allocation15], 4
      %s128 = int_to_ptr.vmem [resolvable:$true] %s127
      %130 = dma.hbm_to_vmem [thread:$0]  %s11, 16, %s128, [#allocation14]
    $region49: #{_vae_forward_call.1} parent=1 // pred_fallthru
      _
    // Predicated region
    $region50: #{_vae_forward_call.1} parent=1 // pred_check
      _
    $region51: #{_vae_forward_call.1} parent=1 // pred_check_branch
      %132 = sbr.rel (0) target = $region53
    $region52: #{_vae_forward_call.1} parent=1 // pred_region
      %s134 = ssub.s32 1024, 1024
      %135 = vsyncadd [#allocation17], %s134
      %s136 = sshll.u32 [#allocation16], 4
      %s137 = int_to_ptr.vmem [resolvable:$true] %s136
      %142 = dma.hbm_to_vmem [thread:$0]  %s12, 1024, %s137, [#allocation17], 64, 64, 4
    $region53: #{_vae_forward_call.1} parent=1 // pred_fallthru
      _
    // Predicated region
    $region54: #{_vae_forward_call.1} parent=1 // pred_check
      _
    $region55: #{_vae_forward_call.1} parent=1 // pred_check_branch
      %144 = sbr.rel (0) target = $region57
    $region56: #{_vae_forward_call.1} parent=1 // pred_region
      %s146 = ssub.s32 16, 16
      %147 = vsyncadd [#allocation17], %s146
      %s149 = sshll.u32 [#allocation18], 4
      %s150 = int_to_ptr.vmem [resolvable:$true] %s149
      %152 = dma.hbm_to_vmem [thread:$0]  %s13, 16, %s150, [#allocation17]
    $region57: #{_vae_forward_call.1} parent=1 // pred_fallthru
      _
    // Predicated region
    $region58: #{_vae_forward_call.1} parent=1 // pred_check
      _
    $region59: #{_vae_forward_call.1} parent=1 // pred_check_branch
      %154 = sbr.rel (0) target = $region61
    $region60: #{_vae_forward_call.1} parent=1 // pred_region
      %155 = dma.done [#allocation3], 16
    $region61: #{_vae_forward_call.1} parent=1 // pred_fallthru
      _
    // Predicated region
    $region62: #{_vae_forward_call.1} parent=1 // pred_check
      _
    $region63: #{_vae_forward_call.1} parent=1 // pred_check_branch
      %157 = sbr.rel (0) target = $region65
    $region64: #{_vae_forward_call.1} parent=1 // pred_region
      %158 = dma.done [#allocation5], 1024
    $region65: #{_vae_forward_call.1} parent=1 // pred_fallthru
      _
    // Predicated region
    $region66: #{_vae_forward_call.1} parent=1 // pred_check
      _
    $region67: #{_vae_forward_call.1} parent=1 // pred_check_branch
      %160 = sbr.rel (0) target = $region69
    $region68: #{_vae_forward_call.1} parent=1 // pred_region
      %161 = dma.done [#allocation5], 16
    $region69: #{_vae_forward_call.1} parent=1 // pred_fallthru
      _
    // Predicated region
    $region70: #{_vae_forward_call.1} parent=1 // pred_check
      _
    $region71: #{_vae_forward_call.1} parent=1 // pred_check_branch
      %163 = sbr.rel (0) target = $region73
    $region72: #{_vae_forward_call.1} parent=1 // pred_region
      %164 = dma.done [#allocation8], 2048
    $region73: #{_vae_forward_call.1} parent=1 // pred_fallthru
      _
    // Predicated region
    $region74: #{_vae_forward_call.1} parent=1 // pred_check
      _
    $region75: #{_vae_forward_call.1} parent=1 // pred_check_branch
      %166 = sbr.rel (0) target = $region77
    $region76: #{_vae_forward_call.1} parent=1 // pred_region
      %167 = dma.done [#allocation8], 32
    $region77: #{_vae_forward_call.1} parent=1 // pred_fallthru
      _
    // Predicated region
    $region78: #{_vae_forward_call.1} parent=1 // pred_check
      _
    $region79: #{_vae_forward_call.1} parent=1 // pred_check_branch
      %169 = sbr.rel (0) target = $region81
    $region80: #{_vae_forward_call.1} parent=1 // pred_region
      %170 = dma.done [#allocation11], 1024
    $region81: #{_vae_forward_call.1} parent=1 // pred_fallthru
      _
    // Predicated region
    $region82: #{_vae_forward_call.1} parent=1 // pred_check
      _
    $region83: #{_vae_forward_call.1} parent=1 // pred_check_branch
      %172 = sbr.rel (0) target = $region85
    $region84: #{_vae_forward_call.1} parent=1 // pred_region
      %173 = dma.done [#allocation11], 16
    $region85: #{_vae_forward_call.1} parent=1 // pred_fallthru
      _
    // Predicated region
    $region86: #{_vae_forward_call.1} parent=1 // pred_check
      _
    $region87: #{_vae_forward_call.1} parent=1 // pred_check_branch
      %175 = sbr.rel (0) target = $region89
    $region88: #{_vae_forward_call.1} parent=1 // pred_region
      %176 = dma.done [#allocation14], 1024
    $region89: #{_vae_forward_call.1} parent=1 // pred_fallthru
      _
    // Predicated region
    $region90: #{_vae_forward_call.1} parent=1 // pred_check
      _
    $region91: #{_vae_forward_call.1} parent=1 // pred_check_branch
      %178 = sbr.rel (0) target = $region93
    $region92: #{_vae_forward_call.1} parent=1 // pred_region
      %179 = dma.done [#allocation14], 16
    $region93: #{_vae_forward_call.1} parent=1 // pred_fallthru
      _
    // Predicated region
    $region94: #{_vae_forward_call.1} parent=1 // pred_check
      _
    $region95: #{_vae_forward_call.1} parent=1 // pred_check_branch
      %181 = sbr.rel (0) target = $region97
    $region96: #{_vae_forward_call.1} parent=1 // pred_region
      %182 = dma.done [#allocation17], 1024
    $region97: #{_vae_forward_call.1} parent=1 // pred_fallthru
      _
    // Predicated region
    $region98: #{_vae_forward_call.1} parent=1 // pred_check
      _
    $region99: #{_vae_forward_call.1} parent=1 // pred_check_branch
      %184 = sbr.rel (0) target = $region101
    $region100: #{_vae_forward_call.1} parent=1 // pred_region
      %185 = dma.done [#allocation17], 16
    $region101: #{_vae_forward_call.1} parent=1 // pred_fallthru
      _
    %v187 = vld [vmem:[%s0] sm:$0xf]
    %v188 = vld [vmem:[%s0 + $0x4] sm:$0xf]
    %v189 = vld [vmem:[%s2] sm:$0xf]
    %v190 = vld [vmem:[%s2 + $0x4] sm:$0xf]
    %v191 = vld [vmem:[%s2 + $0x8] sm:$0xf]
    %v192 = vld [vmem:[%s2 + $0xc] sm:$0xf]
    %v193 = vld [vmem:[%s2 + $0x10] sm:$0xf]
    %v194 = vld [vmem:[%s2 + $0x14] sm:$0xf]
    %v195 = vld [vmem:[%s2 + $0x18] sm:$0xf]
    %v196 = vld [vmem:[%s2 + $0x1c] sm:$0xf]
    %v197 = vld [vmem:[%s2 + $0x20] sm:$0xf]
    %v198 = vld [vmem:[%s2 + $0x24] sm:$0xf]
    %v199 = vld [vmem:[%s2 + $0x28] sm:$0xf]
    %v200 = vld [vmem:[%s2 + $0x2c] sm:$0xf]
    %v201 = vld [vmem:[%s2 + $0x30] sm:$0xf]
    %v202 = vld [vmem:[%s2 + $0x34] sm:$0xf]
    %v203 = vld [vmem:[%s2 + $0x38] sm:$0xf]
    %v204 = vld [vmem:[%s2 + $0x3c] sm:$0xf]
    %v205 = vld [vmem:[#allocation2] sm:$0x1]
    %v207 = vlaneseq
    %v208 = vshrl.u32 %v207, 7
    %v209 = vsub.s32 0, %v208
    %v210 = vrot.slane %v205, %v209
    %v214 = vunpack.c.l.b16 %v187
    %v215 = vunpack.c.l.b16 %v188
    %v216 = vpack.c.b16 %v215, %v214
    %v234 = vunpack.c.l.b16 %v189
    %v235 = vunpack.c.l.b16 %v190
    %v236 = vunpack.c.l.b16 %v191
    %v237 = vunpack.c.l.b16 %v192
    %v238 = vunpack.c.l.b16 %v193
    %v239 = vunpack.c.l.b16 %v194
    %v240 = vunpack.c.l.b16 %v195
    %v241 = vunpack.c.l.b16 %v196
    %v242 = vunpack.c.l.b16 %v197
    %v243 = vunpack.c.l.b16 %v198
    %v244 = vunpack.c.l.b16 %v199
    %v245 = vunpack.c.l.b16 %v200
    %v246 = vunpack.c.l.b16 %v201
    %v247 = vunpack.c.l.b16 %v202
    %v248 = vunpack.c.l.b16 %v203
    %v249 = vunpack.c.l.b16 %v204
    %v250 = vpack.c.b16 %v235, %v234
    %v251 = vpack.c.b16 %v237, %v236
    %v252 = vpack.c.b16 %v239, %v238
    %v253 = vpack.c.b16 %v241, %v240
    %v254 = vpack.c.b16 %v243, %v242
    %v255 = vpack.c.b16 %v245, %v244
    %v256 = vpack.c.b16 %v247, %v246
    %v257 = vpack.c.b16 %v249, %v248
    %266 = vmatprep.subr.bf16.mxu0 0
    %267 = vmatpush1.bf16.msra.mxu0 %v257
    %268 = vmatprep.subr.bf16.mxu0 0
    %269 = vmatpush1.bf16.msra.mxu0 %v256
    %270 = vmatprep.subr.bf16.mxu0 0
    %271 = vmatpush1.bf16.msra.mxu0 %v255
    %272 = vmatprep.subr.bf16.mxu0 0
    %273 = vmatpush1.bf16.msra.mxu0 %v254
    %274 = vmatprep.subr.bf16.mxu0 0
    %275 = vmatpush1.bf16.msra.mxu0 %v253
    %276 = vmatprep.subr.bf16.mxu0 0
    %277 = vmatpush1.bf16.msra.mxu0 %v252
    %278 = vmatprep.subr.bf16.mxu0 0
    %279 = vmatpush1.bf16.msra.mxu0 %v251
    %280 = vmatprep.subr.bf16.mxu0 0
    %281 = vmatpush1.bf16.msra.mxu0 %v250
    %282 = vmatprep.subr.bf16.mxu0 0
    %283 = vmatpush2.bf16.msra.mxu0 0
    %284 = vmatprep.subr.bf16.mxu0 0
    %285 = vmatpush2.bf16.msra.mxu0 0
    %286 = vmatprep.subr.bf16.mxu0 0
    %287 = vmatpush2.bf16.msra.mxu0 0
    %288 = vmatprep.subr.bf16.mxu0 0
    %289 = vmatpush2.bf16.msra.mxu0 0
    %290 = vmatprep.subr.bf16.mxu0 0
    %291 = vmatpush2.bf16.msra.mxu0 0
    %292 = vmatprep.subr.bf16.mxu0 0
    %293 = vmatpush2.bf16.msra.mxu0 0
    %294 = vmatprep.subr.bf16.mxu0 0
    %295 = vmatpush2.bf16.msra.mxu0 0
    %296 = vmatprep.subr.bf16.mxu0 0
    %297 = vmatpush2.bf16.msra.mxu0 0
    %298 = vmatprep.mubr.bf16.mxu0 0
    %299 = vmatmul.mubr.bf16.gmra.mxu0 %v216
    %v300 = vpop.f32.mrf.mxu0
    %v301 = vadd.f32 %v210, %v300
    %v302 = vpop.f32.mrf.mxu0
    %v303 = vpop.f32.mrf.mxu0
    %v304 = vadd.f32 %v210, %v303
    %v305 = vpop.f32.mrf.mxu0
    %306 = vdwg.mxu0
    %v307 = vmul.f32 %v301, 0.01
    %v308 = vmul.f32 %v304, 0.01
    %v309 = vmax.f32 %v301, %v307
    %v310 = vmax.f32 %v304, %v308
    %v311 = vpack.c.bf16 %v310, %v309
    %v312 = vld [vmem:[#allocation4] sm:$0xf]
    %v313 = vld [vmem:[#allocation4 + $0x4] sm:$0xf]
    %v314 = vld [vmem:[#allocation4 + $0x8] sm:$0xf]
    %v315 = vld [vmem:[#allocation4 + $0xc] sm:$0xf]
    %v316 = vld [vmem:[#allocation4 + $0x10] sm:$0xf]
    %v317 = vld [vmem:[#allocation4 + $0x14] sm:$0xf]
    %v318 = vld [vmem:[#allocation4 + $0x18] sm:$0xf]
    %v319 = vld [vmem:[#allocation4 + $0x1c] sm:$0xf]
    %v320 = vld [vmem:[#allocation4 + $0x20] sm:$0xf]
    %v321 = vld [vmem:[#allocation4 + $0x24] sm:$0xf]
    %v322 = vld [vmem:[#allocation4 + $0x28] sm:$0xf]
    %v323 = vld [vmem:[#allocation4 + $0x2c] sm:$0xf]
    %v324 = vld [vmem:[#allocation4 + $0x30] sm:$0xf]
    %v325 = vld [vmem:[#allocation4 + $0x34] sm:$0xf]
    %v326 = vld [vmem:[#allocation4 + $0x38] sm:$0xf]
    %v327 = vld [vmem:[#allocation4 + $0x3c] sm:$0xf]
    %v328 = vld [vmem:[#allocation6] sm:$0x1]
    %v330 = vlaneseq
    %v331 = vshrl.u32 %v330, 7
    %v332 = vsub.s32 0, %v331
    %v333 = vrot.slane %v328, %v332
    %v351 = vunpack.c.l.b16 %v312
    %v352 = vunpack.c.l.b16 %v313
    %v353 = vunpack.c.l.b16 %v314
    %v354 = vunpack.c.l.b16 %v315
    %v355 = vunpack.c.l.b16 %v316
    %v356 = vunpack.c.l.b16 %v317
    %v357 = vunpack.c.l.b16 %v318
    %v358 = vunpack.c.l.b16 %v319
    %v359 = vunpack.c.l.b16 %v320
    %v360 = vunpack.c.l.b16 %v321
    %v361 = vunpack.c.l.b16 %v322
    %v362 = vunpack.c.l.b16 %v323
    %v363 = vunpack.c.l.b16 %v324
    %v364 = vunpack.c.l.b16 %v325
    %v365 = vunpack.c.l.b16 %v326
    %v366 = vunpack.c.l.b16 %v327
    %v367 = vpack.c.b16 %v352, %v351
    %v368 = vpack.c.b16 %v354, %v353
    %v369 = vpack.c.b16 %v356, %v355
    %v370 = vpack.c.b16 %v358, %v357
    %v371 = vpack.c.b16 %v360, %v359
    %v372 = vpack.c.b16 %v362, %v361
    %v373 = vpack.c.b16 %v364, %v363
    %v374 = vpack.c.b16 %v366, %v365
    %383 = vmatprep.subr.bf16.mxu0 0
    %384 = vmatpush1.bf16.msra.mxu0 %v374
    %385 = vmatprep.subr.bf16.mxu0 0
    %386 = vmatpush1.bf16.msra.mxu0 %v373
    %387 = vmatprep.subr.bf16.mxu0 0
    %388 = vmatpush1.bf16.msra.mxu0 %v372
    %389 = vmatprep.subr.bf16.mxu0 0
    %390 = vmatpush1.bf16.msra.mxu0 %v371
    %391 = vmatprep.subr.bf16.mxu0 0
    %392 = vmatpush1.bf16.msra.mxu0 %v370
    %393 = vmatprep.subr.bf16.mxu0 0
    %394 = vmatpush1.bf16.msra.mxu0 %v369
    %395 = vmatprep.subr.bf16.mxu0 0
    %396 = vmatpush1.bf16.msra.mxu0 %v368
    %397 = vmatprep.subr.bf16.mxu0 0
    %398 = vmatpush1.bf16.msra.mxu0 %v367
    %399 = vmatprep.subr.bf16.mxu0 0
    %400 = vmatpush2.bf16.msra.mxu0 0
    %401 = vmatprep.subr.bf16.mxu0 0
    %402 = vmatpush2.bf16.msra.mxu0 0
    %403 = vmatprep.subr.bf16.mxu0 0
    %404 = vmatpush2.bf16.msra.mxu0 0
    %405 = vmatprep.subr.bf16.mxu0 0
    %406 = vmatpush2.bf16.msra.mxu0 0
    %407 = vmatprep.subr.bf16.mxu0 0
    %408 = vmatpush2.bf16.msra.mxu0 0
    %409 = vmatprep.subr.bf16.mxu0 0
    %410 = vmatpush2.bf16.msra.mxu0 0
    %411 = vmatprep.subr.bf16.mxu0 0
    %412 = vmatpush2.bf16.msra.mxu0 0
    %413 = vmatprep.subr.bf16.mxu0 0
    %414 = vmatpush2.bf16.msra.mxu0 0
    %415 = vmatprep.mubr.bf16.mxu0 0
    %416 = vmatmul.mubr.bf16.gmra.mxu0 %v311
    %v417 = vpop.f32.mrf.mxu0
    %v418 = vadd.f32 %v333, %v417
    %v419 = vpop.f32.mrf.mxu0
    %v420 = vpop.f32.mrf.mxu0
    %v421 = vadd.f32 %v333, %v420
    %v422 = vpop.f32.mrf.mxu0
    %423 = vdwg.mxu0
    %v424 = vmul.f32 %v418, 0.01
    %v425 = vmul.f32 %v421, 0.01
    %v426 = vmax.f32 %v418, %v424
    %v427 = vmax.f32 %v421, %v425
    %v428 = vpack.c.bf16 %v427, %v426
    %v429 = vld [vmem:[#allocation7] sm:$0xff]
    %v430 = vld [vmem:[#allocation7 + $0x8] sm:$0xff]
    %v431 = vld [vmem:[#allocation7 + $0x10] sm:$0xff]
    %v432 = vld [vmem:[#allocation7 + $0x18] sm:$0xff]
    %v433 = vld [vmem:[#allocation7 + $0x20] sm:$0xff]
    %v434 = vld [vmem:[#allocation7 + $0x28] sm:$0xff]
    %v435 = vld [vmem:[#allocation7 + $0x30] sm:$0xff]
    %v436 = vld [vmem:[#allocation7 + $0x38] sm:$0xff]
    %v437 = vld [vmem:[#allocation7 + $0x40] sm:$0xff]
    %v438 = vld [vmem:[#allocation7 + $0x48] sm:$0xff]
    %v439 = vld [vmem:[#allocation7 + $0x50] sm:$0xff]
    %v440 = vld [vmem:[#allocation7 + $0x58] sm:$0xff]
    %v441 = vld [vmem:[#allocation7 + $0x60] sm:$0xff]
    %v442 = vld [vmem:[#allocation7 + $0x68] sm:$0xff]
    %v443 = vld [vmem:[#allocation7 + $0x70] sm:$0xff]
    %v444 = vld [vmem:[#allocation7 + $0x78] sm:$0xff]
    %v445 = vld [vmem:[#allocation9] sm:$0x3]
    %v447 = vlaneseq
    %v448 = vshrl.u32 %v447, 7
    %v449 = vsub.s32 0, %v448
    %v450 = vrot.slane %v445, %v449
    %v451 = vlaneseq
    %v452 = vshrl.u32 %v451, 7
    %v453 = vsub.s32 1, %v452
    %v454 = vrot.slane %v445, %v453
    %v473 = vunpack.c.l.b16 %v429
    %v474 = vunpack.c.h.b16 %v429
    %v475 = vunpack.c.l.b16 %v430
    %v476 = vunpack.c.h.b16 %v430
    %v477 = vunpack.c.l.b16 %v431
    %v478 = vunpack.c.h.b16 %v431
    %v479 = vunpack.c.l.b16 %v432
    %v480 = vunpack.c.h.b16 %v432
    %v481 = vunpack.c.l.b16 %v433
    %v482 = vunpack.c.h.b16 %v433
    %v483 = vunpack.c.l.b16 %v434
    %v484 = vunpack.c.h.b16 %v434
    %v485 = vunpack.c.l.b16 %v435
    %v486 = vunpack.c.h.b16 %v435
    %v487 = vunpack.c.l.b16 %v436
    %v488 = vunpack.c.h.b16 %v436
    %v489 = vunpack.c.l.b16 %v437
    %v490 = vunpack.c.h.b16 %v437
    %v491 = vunpack.c.l.b16 %v438
    %v492 = vunpack.c.h.b16 %v438
    %v493 = vunpack.c.l.b16 %v439
    %v494 = vunpack.c.h.b16 %v439
    %v495 = vunpack.c.l.b16 %v440
    %v496 = vunpack.c.h.b16 %v440
    %v497 = vunpack.c.l.b16 %v441
    %v498 = vunpack.c.h.b16 %v441
    %v499 = vunpack.c.l.b16 %v442
    %v500 = vunpack.c.h.b16 %v442
    %v501 = vunpack.c.l.b16 %v443
    %v502 = vunpack.c.h.b16 %v443
    %v503 = vunpack.c.l.b16 %v444
    %v504 = vunpack.c.h.b16 %v444
    %v505 = vpack.c.b16 %v475, %v473
    %v506 = vpack.c.b16 %v476, %v474
    %v507 = vpack.c.b16 %v479, %v477
    %v508 = vpack.c.b16 %v480, %v478
    %v509 = vpack.c.b16 %v483, %v481
    %v510 = vpack.c.b16 %v484, %v482
    %v511 = vpack.c.b16 %v487, %v485
    %v512 = vpack.c.b16 %v488, %v486
    %v513 = vpack.c.b16 %v491, %v489
    %v514 = vpack.c.b16 %v492, %v490
    %v515 = vpack.c.b16 %v495, %v493
    %v516 = vpack.c.b16 %v496, %v494
    %v517 = vpack.c.b16 %v499, %v497
    %v518 = vpack.c.b16 %v500, %v498
    %v519 = vpack.c.b16 %v503, %v501
    %v520 = vpack.c.b16 %v504, %v502
    %537 = vmatprep.subr.bf16.mxu0 %v520
    %538 = vmatpush1.bf16.msra.mxu0 %v519
    %539 = vmatprep.subr.bf16.mxu0 %v518
    %540 = vmatpush1.bf16.msra.mxu0 %v517
    %541 = vmatprep.subr.bf16.mxu0 %v516
    %542 = vmatpush1.bf16.msra.mxu0 %v515
    %543 = vmatprep.subr.bf16.mxu0 %v514
    %544 = vmatpush1.bf16.msra.mxu0 %v513
    %545 = vmatprep.subr.bf16.mxu0 %v512
    %546 = vmatpush1.bf16.msra.mxu0 %v511
    %547 = vmatprep.subr.bf16.mxu0 %v510
    %548 = vmatpush1.bf16.msra.mxu0 %v509
    %549 = vmatprep.subr.bf16.mxu0 %v508
    %550 = vmatpush1.bf16.msra.mxu0 %v507
    %551 = vmatprep.subr.bf16.mxu0 %v506
    %552 = vmatpush1.bf16.msra.mxu0 %v505
    %553 = vmatprep.subr.bf16.mxu0 0
    %554 = vmatpush2.bf16.msra.mxu0 0
    %555 = vmatprep.subr.bf16.mxu0 0
    %556 = vmatpush2.bf16.msra.mxu0 0
    %557 = vmatprep.subr.bf16.mxu0 0
    %558 = vmatpush2.bf16.msra.mxu0 0
    %559 = vmatprep.subr.bf16.mxu0 0
    %560 = vmatpush2.bf16.msra.mxu0 0
    %561 = vmatprep.subr.bf16.mxu0 0
    %562 = vmatpush2.bf16.msra.mxu0 0
    %563 = vmatprep.subr.bf16.mxu0 0
    %564 = vmatpush2.bf16.msra.mxu0 0
    %565 = vmatprep.subr.bf16.mxu0 0
    %566 = vmatpush2.bf16.msra.mxu0 0
    %567 = vmatprep.subr.bf16.mxu0 0
    %568 = vmatpush2.bf16.msra.mxu0 0
    %569 = vmatprep.mubr.bf16.mxu0 0
    %570 = vmatmul.mubr.bf16.gmra.mxu0 %v428
    %v571 = vpop.f32.mrf.mxu0
    %v572 = vadd.f32 %v450, %v571
    %v573 = vpop.f32.mrf.mxu0
    %v574 = vadd.f32 %v454, %v573
    %v575 = vpop.f32.mrf.mxu0
    %v576 = vadd.f32 %v450, %v575
    %v577 = vpop.f32.mrf.mxu0
    %v578 = vadd.f32 %v454, %v577
    %579 = vdwg.mxu0
    %v580 = vld [vmem:[%s1] sm:$0xf]
    %v581 = vld [vmem:[%s1 + $0x4] sm:$0xf]
    %v582 = vunpack.c.l.bf16 %v580
    %v583 = vunpack.c.l.bf16 %v581
    %v584 = vmul.f32 %v574, 0.5
    %v585 = vmul.f32 %v578, 0.5
    %v586 = vmul.f32 %v584, 1.442695
    %v587 = vpow.pop %v586
    %v588 = vmul.f32 %v585, 1.442695
    %v589 = vpow.pop %v588
    %v590 = vmul.f32 %v582, %v587
    %v591 = vmul.f32 %v583, %v589
    %v592 = vadd.f32 %v572, %v590
    %v593 = vadd.f32 %v576, %v591
    %v594 = vpack.c.bf16 %v593, %v592
    %v595 = vld [vmem:[#allocation10] sm:$0xf]
    %v596 = vld [vmem:[#allocation10 + $0x4] sm:$0xf]
    %v597 = vld [vmem:[#allocation10 + $0x8] sm:$0xf]
    %v598 = vld [vmem:[#allocation10 + $0xc] sm:$0xf]
    %v599 = vld [vmem:[#allocation10 + $0x10] sm:$0xf]
    %v600 = vld [vmem:[#allocation10 + $0x14] sm:$0xf]
    %v601 = vld [vmem:[#allocation10 + $0x18] sm:$0xf]
    %v602 = vld [vmem:[#allocation10 + $0x1c] sm:$0xf]
    %v603 = vld [vmem:[#allocation10 + $0x20] sm:$0xf]
    %v604 = vld [vmem:[#allocation10 + $0x24] sm:$0xf]
    %v605 = vld [vmem:[#allocation10 + $0x28] sm:$0xf]
    %v606 = vld [vmem:[#allocation10 + $0x2c] sm:$0xf]
    %v607 = vld [vmem:[#allocation10 + $0x30] sm:$0xf]
    %v608 = vld [vmem:[#allocation10 + $0x34] sm:$0xf]
    %v609 = vld [vmem:[#allocation10 + $0x38] sm:$0xf]
    %v610 = vld [vmem:[#allocation10 + $0x3c] sm:$0xf]
    %v611 = vld [vmem:[#allocation12] sm:$0x1]
    %v613 = vlaneseq
    %v614 = vshrl.u32 %v613, 7
    %v615 = vsub.s32 0, %v614
    %v616 = vrot.slane %v611, %v615
    %v634 = vunpack.c.l.b16 %v595
    %v635 = vunpack.c.l.b16 %v596
    %v636 = vunpack.c.l.b16 %v597
    %v637 = vunpack.c.l.b16 %v598
    %v638 = vunpack.c.l.b16 %v599
    %v639 = vunpack.c.l.b16 %v600
    %v640 = vunpack.c.l.b16 %v601
    %v641 = vunpack.c.l.b16 %v602
    %v642 = vunpack.c.l.b16 %v603
    %v643 = vunpack.c.l.b16 %v604
    %v644 = vunpack.c.l.b16 %v605
    %v645 = vunpack.c.l.b16 %v606
    %v646 = vunpack.c.l.b16 %v607
    %v647 = vunpack.c.l.b16 %v608
    %v648 = vunpack.c.l.b16 %v609
    %v649 = vunpack.c.l.b16 %v610
    %v650 = vpack.c.b16 %v635, %v634
    %v651 = vpack.c.b16 %v637, %v636
    %v652 = vpack.c.b16 %v639, %v638
    %v653 = vpack.c.b16 %v641, %v640
    %v654 = vpack.c.b16 %v643, %v642
    %v655 = vpack.c.b16 %v645, %v644
    %v656 = vpack.c.b16 %v647, %v646
    %v657 = vpack.c.b16 %v649, %v648
    %666 = vmatprep.subr.bf16.mxu0 0
    %667 = vmatpush1.bf16.msra.mxu0 %v657
    %668 = vmatprep.subr.bf16.mxu0 0
    %669 = vmatpush1.bf16.msra.mxu0 %v656
    %670 = vmatprep.subr.bf16.mxu0 0
    %671 = vmatpush1.bf16.msra.mxu0 %v655
    %672 = vmatprep.subr.bf16.mxu0 0
    %673 = vmatpush1.bf16.msra.mxu0 %v654
    %674 = vmatprep.subr.bf16.mxu0 0
    %675 = vmatpush1.bf16.msra.mxu0 %v653
    %676 = vmatprep.subr.bf16.mxu0 0
    %677 = vmatpush1.bf16.msra.mxu0 %v652
    %678 = vmatprep.subr.bf16.mxu0 0
    %679 = vmatpush1.bf16.msra.mxu0 %v651
    %680 = vmatprep.subr.bf16.mxu0 0
    %681 = vmatpush1.bf16.msra.mxu0 %v650
    %682 = vmatprep.subr.bf16.mxu0 0
    %683 = vmatpush2.bf16.msra.mxu0 0
    %684 = vmatprep.subr.bf16.mxu0 0
    %685 = vmatpush2.bf16.msra.mxu0 0
    %686 = vmatprep.subr.bf16.mxu0 0
    %687 = vmatpush2.bf16.msra.mxu0 0
    %688 = vmatprep.subr.bf16.mxu0 0
    %689 = vmatpush2.bf16.msra.mxu0 0
    %690 = vmatprep.subr.bf16.mxu0 0
    %691 = vmatpush2.bf16.msra.mxu0 0
    %692 = vmatprep.subr.bf16.mxu0 0
    %693 = vmatpush2.bf16.msra.mxu0 0
    %694 = vmatprep.subr.bf16.mxu0 0
    %695 = vmatpush2.bf16.msra.mxu0 0
    %696 = vmatprep.subr.bf16.mxu0 0
    %697 = vmatpush2.bf16.msra.mxu0 0
    %698 = vmatprep.mubr.bf16.mxu0 0
    %699 = vmatmul.mubr.bf16.gmra.mxu0 %v594
    %v700 = vpop.f32.mrf.mxu0
    %v701 = vadd.f32 %v616, %v700
    %v702 = vpop.f32.mrf.mxu0
    %v703 = vpop.f32.mrf.mxu0
    %v704 = vadd.f32 %v616, %v703
    %v705 = vpop.f32.mrf.mxu0
    %706 = vdwg.mxu0
    %v707 = vmul.f32 %v701, 0.01
    %v708 = vmul.f32 %v704, 0.01
    %v709 = vmax.f32 %v701, %v707
    %v710 = vmax.f32 %v704, %v708
    %v711 = vpack.c.bf16 %v710, %v709
    %v712 = vld [vmem:[#allocation13] sm:$0xf]
    %v713 = vld [vmem:[#allocation13 + $0x4] sm:$0xf]
    %v714 = vld [vmem:[#allocation13 + $0x8] sm:$0xf]
    %v715 = vld [vmem:[#allocation13 + $0xc] sm:$0xf]
    %v716 = vld [vmem:[#allocation13 + $0x10] sm:$0xf]
    %v717 = vld [vmem:[#allocation13 + $0x14] sm:$0xf]
    %v718 = vld [vmem:[#allocation13 + $0x18] sm:$0xf]
    %v719 = vld [vmem:[#allocation13 + $0x1c] sm:$0xf]
    %v720 = vld [vmem:[#allocation13 + $0x20] sm:$0xf]
    %v721 = vld [vmem:[#allocation13 + $0x24] sm:$0xf]
    %v722 = vld [vmem:[#allocation13 + $0x28] sm:$0xf]
    %v723 = vld [vmem:[#allocation13 + $0x2c] sm:$0xf]
    %v724 = vld [vmem:[#allocation13 + $0x30] sm:$0xf]
    %v725 = vld [vmem:[#allocation13 + $0x34] sm:$0xf]
    %v726 = vld [vmem:[#allocation13 + $0x38] sm:$0xf]
    %v727 = vld [vmem:[#allocation13 + $0x3c] sm:$0xf]
    %v728 = vld [vmem:[#allocation15] sm:$0x1]
    %v730 = vlaneseq
    %v731 = vshrl.u32 %v730, 7
    %v732 = vsub.s32 0, %v731
    %v733 = vrot.slane %v728, %v732
    %v751 = vunpack.c.l.b16 %v712
    %v752 = vunpack.c.l.b16 %v713
    %v753 = vunpack.c.l.b16 %v714
    %v754 = vunpack.c.l.b16 %v715
    %v755 = vunpack.c.l.b16 %v716
    %v756 = vunpack.c.l.b16 %v717
    %v757 = vunpack.c.l.b16 %v718
    %v758 = vunpack.c.l.b16 %v719
    %v759 = vunpack.c.l.b16 %v720
    %v760 = vunpack.c.l.b16 %v721
    %v761 = vunpack.c.l.b16 %v722
    %v762 = vunpack.c.l.b16 %v723
    %v763 = vunpack.c.l.b16 %v724
    %v764 = vunpack.c.l.b16 %v725
    %v765 = vunpack.c.l.b16 %v726
    %v766 = vunpack.c.l.b16 %v727
    %v767 = vpack.c.b16 %v752, %v751
    %v768 = vpack.c.b16 %v754, %v753
    %v769 = vpack.c.b16 %v756, %v755
    %v770 = vpack.c.b16 %v758, %v757
    %v771 = vpack.c.b16 %v760, %v759
    %v772 = vpack.c.b16 %v762, %v761
    %v773 = vpack.c.b16 %v764, %v763
    %v774 = vpack.c.b16 %v766, %v765
    %783 = vmatprep.subr.bf16.mxu0 0
    %784 = vmatpush1.bf16.msra.mxu0 %v774
    %785 = vmatprep.subr.bf16.mxu0 0
    %786 = vmatpush1.bf16.msra.mxu0 %v773
    %787 = vmatprep.subr.bf16.mxu0 0
    %788 = vmatpush1.bf16.msra.mxu0 %v772
    %789 = vmatprep.subr.bf16.mxu0 0
    %790 = vmatpush1.bf16.msra.mxu0 %v771
    %791 = vmatprep.subr.bf16.mxu0 0
    %792 = vmatpush1.bf16.msra.mxu0 %v770
    %793 = vmatprep.subr.bf16.mxu0 0
    %794 = vmatpush1.bf16.msra.mxu0 %v769
    %795 = vmatprep.subr.bf16.mxu0 0
    %796 = vmatpush1.bf16.msra.mxu0 %v768
    %797 = vmatprep.subr.bf16.mxu0 0
    %798 = vmatpush1.bf16.msra.mxu0 %v767
    %799 = vmatprep.subr.bf16.mxu0 0
    %800 = vmatpush2.bf16.msra.mxu0 0
    %801 = vmatprep.subr.bf16.mxu0 0
    %802 = vmatpush2.bf16.msra.mxu0 0
    %803 = vmatprep.subr.bf16.mxu0 0
    %804 = vmatpush2.bf16.msra.mxu0 0
    %805 = vmatprep.subr.bf16.mxu0 0
    %806 = vmatpush2.bf16.msra.mxu0 0
    %807 = vmatprep.subr.bf16.mxu0 0
    %808 = vmatpush2.bf16.msra.mxu0 0
    %809 = vmatprep.subr.bf16.mxu0 0
    %810 = vmatpush2.bf16.msra.mxu0 0
    %811 = vmatprep.subr.bf16.mxu0 0
    %812 = vmatpush2.bf16.msra.mxu0 0
    %813 = vmatprep.subr.bf16.mxu0 0
    %814 = vmatpush2.bf16.msra.mxu0 0
    %815 = vmatprep.mubr.bf16.mxu0 0
    %816 = vmatmul.mubr.bf16.gmra.mxu0 %v711
    %v817 = vpop.f32.mrf.mxu0
    %v818 = vadd.f32 %v733, %v817
    %v819 = vpop.f32.mrf.mxu0
    %v820 = vpop.f32.mrf.mxu0
    %v821 = vadd.f32 %v733, %v820
    %v822 = vpop.f32.mrf.mxu0
    %823 = vdwg.mxu0
    %v824 = vmul.f32 %v818, 0.01
    %v825 = vmul.f32 %v821, 0.01
    %v826 = vmax.f32 %v818, %v824
    %v827 = vmax.f32 %v821, %v825
    %v828 = vpack.c.bf16 %v827, %v826
    %v829 = vld [vmem:[#allocation16] sm:$0xf]
    %v830 = vld [vmem:[#allocation16 + $0x4] sm:$0xf]
    %v831 = vld [vmem:[#allocation16 + $0x8] sm:$0xf]
    %v832 = vld [vmem:[#allocation16 + $0xc] sm:$0xf]
    %v833 = vld [vmem:[#allocation16 + $0x10] sm:$0xf]
    %v834 = vld [vmem:[#allocation16 + $0x14] sm:$0xf]
    %v835 = vld [vmem:[#allocation16 + $0x18] sm:$0xf]
    %v836 = vld [vmem:[#allocation16 + $0x1c] sm:$0xf]
    %v837 = vld [vmem:[#allocation16 + $0x20] sm:$0xf]
    %v838 = vld [vmem:[#allocation16 + $0x24] sm:$0xf]
    %v839 = vld [vmem:[#allocation16 + $0x28] sm:$0xf]
    %v840 = vld [vmem:[#allocation16 + $0x2c] sm:$0xf]
    %v841 = vld [vmem:[#allocation16 + $0x30] sm:$0xf]
    %v842 = vld [vmem:[#allocation16 + $0x34] sm:$0xf]
    %v843 = vld [vmem:[#allocation16 + $0x38] sm:$0xf]
    %v844 = vld [vmem:[#allocation16 + $0x3c] sm:$0xf]
    %v845 = vld [vmem:[#allocation18] sm:$0x1]
    %v847 = vlaneseq
    %v848 = vshrl.u32 %v847, 7
    %v849 = vsub.s32 0, %v848
    %v850 = vrot.slane %v845, %v849
    %v868 = vunpack.c.l.b16 %v829
    %v869 = vunpack.c.l.b16 %v830
    %v870 = vunpack.c.l.b16 %v831
    %v871 = vunpack.c.l.b16 %v832
    %v872 = vunpack.c.l.b16 %v833
    %v873 = vunpack.c.l.b16 %v834
    %v874 = vunpack.c.l.b16 %v835
    %v875 = vunpack.c.l.b16 %v836
    %v876 = vunpack.c.l.b16 %v837
    %v877 = vunpack.c.l.b16 %v838
    %v878 = vunpack.c.l.b16 %v839
    %v879 = vunpack.c.l.b16 %v840
    %v880 = vunpack.c.l.b16 %v841
    %v881 = vunpack.c.l.b16 %v842
    %v882 = vunpack.c.l.b16 %v843
    %v883 = vunpack.c.l.b16 %v844
    %v884 = vpack.c.b16 %v869, %v868
    %v885 = vpack.c.b16 %v871, %v870
    %v886 = vpack.c.b16 %v873, %v872
    %v887 = vpack.c.b16 %v875, %v874
    %v888 = vpack.c.b16 %v877, %v876
    %v889 = vpack.c.b16 %v879, %v878
    %v890 = vpack.c.b16 %v881, %v880
    %v891 = vpack.c.b16 %v883, %v882
    %900 = vmatprep.subr.bf16.mxu0 0
    %901 = vmatpush1.bf16.msra.mxu0 %v891
    %902 = vmatprep.subr.bf16.mxu0 0
    %903 = vmatpush1.bf16.msra.mxu0 %v890
    %904 = vmatprep.subr.bf16.mxu0 0
    %905 = vmatpush1.bf16.msra.mxu0 %v889
    %906 = vmatprep.subr.bf16.mxu0 0
    %907 = vmatpush1.bf16.msra.mxu0 %v888
    %908 = vmatprep.subr.bf16.mxu0 0
    %909 = vmatpush1.bf16.msra.mxu0 %v887
    %910 = vmatprep.subr.bf16.mxu0 0
    %911 = vmatpush1.bf16.msra.mxu0 %v886
    %912 = vmatprep.subr.bf16.mxu0 0
    %913 = vmatpush1.bf16.msra.mxu0 %v885
    %914 = vmatprep.subr.bf16.mxu0 0
    %915 = vmatpush1.bf16.msra.mxu0 %v884
    %916 = vmatprep.subr.bf16.mxu0 0
    %917 = vmatpush2.bf16.msra.mxu0 0
    %918 = vmatprep.subr.bf16.mxu0 0
    %919 = vmatpush2.bf16.msra.mxu0 0
    %920 = vmatprep.subr.bf16.mxu0 0
    %921 = vmatpush2.bf16.msra.mxu0 0
    %922 = vmatprep.subr.bf16.mxu0 0
    %923 = vmatpush2.bf16.msra.mxu0 0
    %924 = vmatprep.subr.bf16.mxu0 0
    %925 = vmatpush2.bf16.msra.mxu0 0
    %926 = vmatprep.subr.bf16.mxu0 0
    %927 = vmatpush2.bf16.msra.mxu0 0
    %928 = vmatprep.subr.bf16.mxu0 0
    %929 = vmatpush2.bf16.msra.mxu0 0
    %930 = vmatprep.subr.bf16.mxu0 0
    %931 = vmatpush2.bf16.msra.mxu0 0
    %932 = vmatprep.mubr.bf16.mxu0 0
    %933 = vmatmul.mubr.bf16.gmra.mxu0 %v828
    %v934 = vpop.f32.mrf.mxu0
    %v935 = vadd.f32 %v850, %v934
    %v936 = vpop.f32.mrf.mxu0
    %v937 = vpop.f32.mrf.mxu0
    %v938 = vadd.f32 %v850, %v937
    %v939 = vpop.f32.mrf.mxu0
    %940 = vdwg.mxu0
    %v941 = vmax.f32 %v935, 0.0
    %v942 = vmax.f32 %v938, 0.0
    %v943 = vpack.c.bf16 %v942, %v941
    %v945 = vunpack.c.l.b16 %v943
    %v946 = vunpack.c.h.b16 %v943
    %v947 = vpack.c.b16 %v945, %v945
    %v948 = vpack.c.b16 %v946, %v946
    %951 = vst [vmem:[%s14] sm:$0xf] %v947
    %952 = vst [vmem:[%s14 + $0x4] sm:$0xf] %v948
    %953 = vst [vmem:[%s15] sm:$0xff] %v572
    %954 = vst [vmem:[%s15 + $0x8] sm:$0xff] %v574
    %955 = vst [vmem:[%s15 + $0x10] sm:$0xff] %v576
    %956 = vst [vmem:[%s15 + $0x18] sm:$0xff] %v578
    // Predicated region
    $region102: #{_vae_forward_call.1} parent=1 // pred_check
      _
    $region103: #{_vae_forward_call.1} parent=1 // pred_check_branch
      %958 = sbr.rel (0) target = $region105
    $region104: #{_vae_forward_call.1} parent=1 // pred_region
      _
    $region105: #{_vae_forward_call.1} parent=1 // pred_fallthru
      _
    // Predicated region
    $region106: #{_vae_forward_call.1} parent=1 // pred_check
      _
    $region107: #{_vae_forward_call.1} parent=1 // pred_check_branch
      %960 = sbr.rel (0) target = $region109
    $region108: #{_vae_forward_call.1} parent=1 // pred_region
      _
    $region109: #{_vae_forward_call.1} parent=1 // pred_fallthru
      _
    // Predicated region
    $region110: #{_vae_forward_call.1} parent=1 // pred_check
      _
    $region111: #{_vae_forward_call.1} parent=1 // pred_check_branch
      %962 = sbr.rel (0) target = $region113
    $region112: #{_vae_forward_call.1} parent=1 // pred_region
      _
    $region113: #{_vae_forward_call.1} parent=1 // pred_fallthru
      _
    // Predicated region
    $region114: #{_vae_forward_call.1} parent=1 // pred_check
      _
    $region115: #{_vae_forward_call.1} parent=1 // pred_check_branch
      %964 = sbr.rel (0) target = $region117
    $region116: #{_vae_forward_call.1} parent=1 // pred_region
      _
    $region117: #{_vae_forward_call.1} parent=1 // pred_fallthru
      _
    %965 = vsyncpa [#allocation3], 1
    %966 = vsyncpa [#allocation5], 1
    %967 = vsyncpa [#allocation8], 1
    %968 = vsyncpa [#allocation11], 1
    %969 = vsyncpa [#allocation14], 1
    %970 = vsyncpa [#allocation17], 1

</llo_original>
